<compile_context>
chip_gen: v7x
topology: tpu7x:2x2x1
jax: 0.10.0
libtpu: 0.0.40
codegen_flags: <defaults>
</compile_context>

<pallas_src>
import functools

import jax
import jax.numpy as jnp
from jax import lax
from jax.experimental import pallas as pl
from jax.experimental.pallas import tpu as pltpu


# ----------------------------------------------------------------------------
# Pallas kernel: fused (ProjectorBlock +) LinearAttentionBlock.
# ----------------------------------------------------------------------------
def _linear_attn_kernel(wg_ref, l_ref, w_ref, c_ref, out_ref, *,
                        normalize_attn, has_proj, c_out, s_valid, inv_s, bt):
    # wg_ref : (N,) SMEM          per-batch scalar  w_c . g   (scalar prefetch)
    # l_ref  : (bt, C_in, S_pad)  local features: channels on sublanes, spatial on lanes
    # w_ref  : (rows, C_in)       rows = C_aug (proj_w with w_c@proj_w folded in) or 1 (w_c)
    w = w_ref[...]
    base = pl.program_id(0) * bt
    s_pad = l_ref.shape[-1]

    if s_pad > s_valid:   # hoisted lane-validity mask for the zero-padded spatial lanes
        valid = lax.broadcasted_iota(jnp.int32, (1, s_pad), 1) < s_valid
    else:
        valid = None

    def body(b, carry):
        lb = l_ref[b]                                                   # (C_in, S_pad)
        # 1x1 conv(s) as a single MXU matmul; for attn1 the C->1 attention conv is a
        # folded extra row of w, so no (C,S) add / VPU multiply / sublane reduce is needed.
        yb = jnp.dot(w, lb, preferred_element_type=jnp.float32)        # (rows, S_pad) f32
        c_pre = yb[c_out:c_out + 1, :] if has_proj else yb             # (1, S_pad)
        c = c_pre + wg_ref[base + b]                                    # + scalar  w_c . g

        if normalize_attn:
            cm = jnp.where(valid, c, -jnp.inf) if valid is not None else c
            m = jnp.max(cm, axis=1, keepdims=True)
            e = jnp.exp(cm - m)
            a = e * pl.reciprocal(jnp.sum(e, axis=1, keepdims=True), approx=True)
        else:
            a = jax.nn.sigmoid(c) * inv_s        # adaptive_avg_pool2d folded into a
            if valid is not None:
                a = jnp.where(valid, a, 0.0)

        # pooled feature  feat[c] = sum_s a[s] * l_proj[c,s]: (1,S)x(rows,S)^T on the MXU,
        # lane-dense (1, rows) result.
        src = yb if has_proj else lb
        feat = lax.dot_general(a.astype(src.dtype), src, (((1,), (1,)), ((), ())),
                               preferred_element_type=jnp.float32)      # (1, rows)

        c_ref[b] = c.astype(c_ref.dtype)                                # raw 1x1-conv output
        out_ref[b] = feat[:, :c_out].astype(out_ref.dtype)
        return carry

    lax.fori_loop(0, bt, body, 0, unroll=True)


def _auto_batch_tile(n, per_item_bytes, cap_bytes=8 << 20):
    """Largest batch tile dividing n that keeps per-step VMEM small and grid length >= 2."""
    best = 1
    for cand in range(1, n + 1):
        if n % cand:
            continue
        if n >= 2 and n // cand < 2:      # keep >= 2 grid steps (two TensorCores on v7x)
            continue
        if cand * per_item_bytes > cap_bytes:
            continue
        best = max(best, cand)
    return best


def linear_attention(l_nchw, g_nc11, w_c, proj_w=None, *, normalize_attn=True,
                     mxu_dtype=jnp.bfloat16, bt=None):
    """(ProjectorBlock +) LinearAttentionBlock as one fused Pallas kernel.

    l_nchw : (N, C_in, W, H) local features
    g_nc11 : (N, C_out, 1, 1) global feature (output of `dense`)
    w_c    : (C_out,) attention 1x1-conv weight (no bias)
    proj_w : optional (C_out, C_in) 1x1 projection weight (no bias)
    returns (c (N,1,W,H), pooled feature (N, C_out))
    """
    N, C_in, W, H = l_nchw.shape
    S = W * H
    has_proj = proj_w is not None
    C_out = proj_w.shape[0] if has_proj else C_in

    # spatial on lanes; pad to a multiple of 128 so the c store is lane-dense (padded
    # lanes are masked inside the kernel).
    S_pad = ((S + 127) // 128) * 128
    l_flat = l_nchw.reshape(N, C_in, S)                       # pure reshape of NCHW
    if S_pad != S:
        l_flat = jnp.pad(l_flat, ((0, 0), (0, 0), (0, S_pad - S)))
    l_flat = l_flat.astype(mxu_dtype)

    g_vec = g_nc11.reshape(N, C_out).astype(jnp.float32)
    w32 = w_c.astype(jnp.float32)
    # per-batch scalar  w_c . g  -> SMEM via scalar prefetch (no per-step DMA of g)
    wg = jnp.einsum('o,no->n', w32, g_vec, precision=lax.Precision.HIGHEST)

    if has_proj:
        # Fold the C_out->1 attention conv into the projector matmul:
        #   rows 0..C_out-1 : proj_w      rows C_out : w_c @ proj_w      rest : zero pad
        p32 = proj_w.astype(jnp.float32)
        w_row = jnp.einsum('o,oc->c', w32, p32, precision=lax.Precision.HIGHEST)
        rows = ((C_out + 1 + 7) // 8) * 8                     # sublane multiple
        wmat = jnp.zeros((rows, C_in), jnp.float32)
        wmat = wmat.at[:C_out].set(p32).at[C_out].set(w_row)
    else:
        rows = 1
        wmat = w32.reshape(1, C_in)
    wmat = wmat.astype(mxu_dtype)

    # batch tile / VMEM sizing (v7x: 64 MiB VMEM; v5e scoped default is only 16 MiB).
    itemsize = jnp.dtype(mxu_dtype).itemsize
    per_item = (2 * C_in * S_pad * itemsize          # l block, double-buffered
                + rows * S_pad * 4                   # f32 matmul result
                + 2 * (S_pad + C_out) * 4)           # outputs, double-buffered
    if bt is None:
        bt = _auto_batch_tile(N, per_item)
    assert N % bt == 0
    vmem_limit = int(min(max(3 * bt * per_item + (2 << 20), 32 << 20), 64 << 20))

    kernel = functools.partial(_linear_attn_kernel, normalize_attn=normalize_attn,
                               has_proj=has_proj, c_out=C_out, s_valid=S,
                               inv_s=1.0 / S, bt=bt)

    c_flat, feat = pl.pallas_call(
        kernel,
        out_shape=(jax.ShapeDtypeStruct((N, 1, S_pad), jnp.float32),
                   jax.ShapeDtypeStruct((N, 1, C_out), jnp.float32)),
        grid_spec=pltpu.PrefetchScalarGridSpec(
            num_scalar_prefetch=1,                    # wg -> SMEM
            grid=(N // bt,),
            in_specs=[pl.BlockSpec((bt, C_in, S_pad), lambda n, wg: (n, 0, 0)),
                      pl.BlockSpec((rows, C_in), lambda n, wg: (0, 0))],
            out_specs=(pl.BlockSpec((bt, 1, S_pad), lambda n, wg: (n, 0, 0)),
                       pl.BlockSpec((bt, 1, C_out), lambda n, wg: (n, 0, 0))),
        ),
        compiler_params=pltpu.CompilerParams(
            dimension_semantics=("parallel",),        # batch steps independent -> megacore
            vmem_limit_bytes=vmem_limit),
    )(wg, l_flat, wmat)

    return c_flat[:, :, :S].reshape(N, 1, W, H), feat.reshape(N, C_out)


# ----------------------------------------------------------------------------
# VGG backbone (plain XLA) -- ConvBlock / maxpool / dense from the PyTorch module.
# ----------------------------------------------------------------------------
def _conv2d(x, w, b=None, *, padding):
    y = lax.conv_general_dilated(x, w, window_strides=(1, 1), padding=padding,
                                 dimension_numbers=('NCHW', 'OIHW', 'NCHW'))
    if b is not None:
        y = y + b[None, :, None, None]
    return y


def _bn_eval(x, gamma, beta, mean, var, eps=1e-5):
    scale = gamma * lax.rsqrt(var + eps)
    return x * scale[None, :, None, None] + (beta - mean * scale)[None, :, None, None]


def _maxpool2(x):
    return lax.reduce_window(x, -jnp.inf, lax.max, (1, 1, 2, 2), (1, 1, 2, 2), 'VALID')


def _conv_block(x, layers, pool):
    for (w, b, gamma, beta, mean, var) in layers:
        x = jnp.maximum(_bn_eval(_conv2d(x, w, b, padding=((1, 1), (1, 1))),
                                 gamma, beta, mean, var), 0.0)
        if pool:
            x = _maxpool2(x)
    return x


def backbone(x, p):
    x = _conv_block(x, p['block1'], pool=False)
    x = _conv_block(x, p['block2'], pool=False)
    l1 = _conv_block(x, p['block3'], pool=False)
    x = _maxpool2(l1)
    l2 = _conv_block(x, p['block4'], pool=False)
    x = _maxpool2(l2)
    l3 = _conv_block(x, p['block5'], pool=False)
    x = _maxpool2(l3)
    x = _conv_block(x, p['block6'], pool=True)
    g = _conv2d(x, p['dense_w'], p['dense_b'], padding=((0, 0), (0, 0)))   # (N, C, 1, 1)
    return l1, l2, l3, g


def attn_vgg_before(x, p, *, normalize_attn=True, attention=True,
                    mxu_dtype=jnp.bfloat16, bt=None):
    """Forward pass of AttnVGG_before (attention heads on Pallas)."""
    l1, l2, l3, g = backbone(x, p)
    if not attention:
        return dict(feature=g, c1=None, c2=None, c3=None)
    c1, g1 = linear_attention(l1, g, p['attn1_w'], proj_w=p['proj_w'],
                              normalize_attn=normalize_attn, mxu_dtype=mxu_dtype, bt=bt)
    c2, g2 = linear_attention(l2, g, p['attn2_w'],
                              normalize_attn=normalize_attn, mxu_dtype=mxu_dtype, bt=bt)
    c3, g3 = linear_attention(l3, g, p['attn3_w'],
                              normalize_attn=normalize_attn, mxu_dtype=mxu_dtype, bt=bt)
    feature = jnp.concatenate((g1, g2, g3), axis=1)
    return dict(feature=feature, c1=c1, c2=c2, c3=c3)


# ----------------------------------------------------------------------------
# Deterministic parameter construction (width-scaled VGG for a small demo).
# ----------------------------------------------------------------------------
def make_params(key, widths=(4, 8, 16, 32, 32, 32), num_convs=(2, 2, 3, 3, 3, 2), im_size=32):
    p = {}
    keys = iter(jax.random.split(key, 64))

    def conv_bn(c_in, c_out):
        kw, kg = next(keys), next(keys)
        fan_in = c_in * 9
        w = jax.random.normal(kw, (c_out, c_in, 3, 3), jnp.float32) * jnp.sqrt(2.0 / fan_in)
        b = jnp.zeros((c_out,), jnp.float32)
        gamma = jax.random.uniform(kg, (c_out,), jnp.float32, 0.5, 1.5)
        beta = jnp.zeros((c_out,), jnp.float32)
        mean = jnp.zeros((c_out,), jnp.float32)
        var = jnp.ones((c_out,), jnp.float32)
        return (w, b, gamma, beta, mean, var)

    c_prev = 3
    for bi, (c_out, n) in enumerate(zip(widths, num_convs), start=1):
        feats = [c_prev] + [c_out] * n
        p[f'block{bi}'] = [conv_bn(feats[i], feats[i + 1]) for i in range(n)]
        c_prev = c_out

    c_att = widths[-1]            # "512" analogue
    c_l1 = widths[2]              # "256" analogue
    k_dense = im_size // 32
    p['dense_w'] = jax.random.normal(next(keys), (c_att, c_att, k_dense, k_dense),
                                     jnp.float32) * jnp.sqrt(2.0 / (c_att * k_dense * k_dense))
    p['dense_b'] = jnp.zeros((c_att,), jnp.float32)
    p['proj_w'] = jax.random.normal(next(keys), (c_att, c_l1), jnp.float32) * jnp.sqrt(2.0 / c_l1)
    for name in ('attn1_w', 'attn2_w', 'attn3_w'):
        p[name] = jax.random.normal(next(keys), (c_att,), jnp.float32) * jnp.sqrt(2.0 / c_att)
    return p


# ----------------------------------------------------------------------------
# Pure-JAX reference for the attention heads (mirrors the PyTorch forward).
# ----------------------------------------------------------------------------
def _ref_attention(l, g, w, proj_w=None, *, normalize_attn=True):
    if proj_w is not None:
        l = jnp.einsum('oc,nchw->nohw', proj_w, l, precision=lax.Precision.HIGHEST)
    N, C, W, H = l.shape
    c = jnp.einsum('c,nchw->nhw', w, l + g, precision=lax.Precision.HIGHEST)[:, None]
    if normalize_attn:
        a = jax.nn.softmax(c.reshape(N, 1, -1), axis=2).reshape(N, 1, W, H)
    else:
        a = jax.nn.sigmoid(c)
    f = a * l
    if normalize_attn:
        feat = f.reshape(N, C, -1).sum(axis=2)
    else:
        feat = f.mean(axis=(2, 3))
    return c, feat


if __name__ == "__main__":
    key = jax.random.PRNGKey(0)
    kx, kp = jax.random.split(key)

    im_size, N = 32, 2
    widths = (4, 8, 16, 32, 32, 32)       # width-scaled (real model: 64,128,256,512,512,512)
    params = make_params(kp, widths=widths, im_size=im_size)
    x = jax.random.normal(kx, (N, 3, im_size, im_size), jnp.float32)

    # default path: bf16 MXU feeds (performance configuration)
    fwd = jax.jit(functools.partial(attn_vgg_before, normalize_attn=True, attention=True))
    out = fwd(x, params)
    jax.block_until_ready(out)

    # -------- verify the Pallas attention heads against the pure-JAX reference --------
    l1, l2, l3, g = jax.jit(backbone)(x, params)
    c1r, g1r = _ref_attention(l1, g, params['attn1_w'], proj_w=params['proj_w'],
                              normalize_attn=True)
    c2r, g2r = _ref_attention(l2, g, params['attn2_w'], normalize_attn=True)
    c3r, g3r = _ref_attention(l3, g, params['attn3_w'], normalize_attn=True)
    feat_r = jnp.concatenate((g1r, g2r, g3r), axis=1)

    C_att = widths[-1]
    assert out['c1'].shape == (N, 1, im_size, im_size)
    assert out['c2'].shape == (N, 1, im_size // 2, im_size // 2)
    assert out['c3'].shape == (N, 1, im_size // 4, im_size // 4)
    assert out['feature'].shape == (N, 3 * C_att)

    # bf16-MXU path: loose tolerance (bf16 operand rounding)
    for name, got, ref in (("c1", out['c1'], c1r), ("c2", out['c2'], c2r),
                           ("c3", out['c3'], c3r), ("feature", out['feature'], feat_r)):
        assert bool(jnp.allclose(got, ref, atol=1e-1, rtol=1e-1)), f"bf16 mismatch in {name}"

    # f32-MXU path: tight tolerance (validates the folded-conv / masked-pad structure;
    # approx reciprocal + MXU pass ordering shift results slightly vs HIGHEST reference)
    fwd32 = jax.jit(functools.partial(attn_vgg_before, normalize_attn=True, attention=True,
                                      mxu_dtype=jnp.float32))
    out32 = fwd32(x, params)
    jax.block_until_ready(out32)
    for name, got, ref in (("c1", out32['c1'], c1r), ("c2", out32['c2'], c2r),
                           ("c3", out32['c3'], c3r), ("feature", out32['feature'], feat_r)):
        assert bool(jnp.allclose(got, ref, atol=1e-2, rtol=1e-2)), f"f32 mismatch in {name}"

    # sigmoid / adaptive_avg_pool2d path (normalize_attn=False)
    c2s, g2s = linear_attention(l2, g, params['attn2_w'], normalize_attn=False,
                                mxu_dtype=jnp.float32)
    c2sr, g2sr = _ref_attention(l2, g, params['attn2_w'], normalize_attn=False)
    jax.block_until_ready((c2s, g2s))
    assert bool(jnp.allclose(c2s, c2sr, atol=1e-2, rtol=1e-2))
    assert bool(jnp.allclose(g2s, g2sr, atol=1e-2, rtol=1e-2))

    print("KERNEL_OK")
</pallas_src>

<mosaic_0001>
module attributes {stable_mosaic.version = 11 : i64} {
  func.func @_linear_attn_kernel(%arg0: i32, %arg1: memref<2xf32, #tpu.memory_space<smem>>, %arg2: memref<1x32x128xbf16, #tpu.memory_space<vmem>>, %arg3: memref<1x32xbf16, #tpu.memory_space<vmem>>, %arg4: memref<1x1x128xf32, #tpu.memory_space<vmem>>, %arg5: memref<1x1x32xf32, #tpu.memory_space<vmem>>) attributes {dimension_semantics = [#tpu.dimension_semantics<parallel>], iteration_bounds = array<i64: 2>, scalar_prefetch = 1 : i64, scratch_operands = 0 : i64, tpu.core_type = #tpu.core_type<tc>, window_params = [{transform_indices = @transform_0, window_bounds = array<i64: 1, 32, 128>}, {pipeline_mode = #tpu.pipeline_mode<synchronous>, transform_indices = @transform_1, window_bounds = array<i64: 1, 32>}, {transform_indices = @transform_2, window_bounds = array<i64: 1, 1, 128>}, {transform_indices = @transform_3, window_bounds = array<i64: 1, 1, 32>}]} {
    %c0 = arith.constant 0 : index
    %c0_0 = arith.constant 0 : index
    %0 = vector.load %arg3[%c0, %c0_0] : memref<1x32xbf16, #tpu.memory_space<vmem>>, vector<1x32xbf16>
    %c1_i32 = arith.constant 1 : i32
    %1 = arith.muli %arg0, %c1_i32 : i32
    %2 = tpu.iota {dimensions = array<i32: 1>} : vector<1x128xi32>
    %c64_i32 = arith.constant 64 : i32
    %3 = vector.broadcast %c64_i32 : i32 to vector<1x128xi32>
    %4 = arith.cmpi slt, %2, %3 : vector<1x128xi32>
    %c0_i32 = arith.constant 0 : i32
    %5 = arith.index_cast %c0_i32 : i32 to index
    %c0_1 = arith.constant 0 : index
    %c0_2 = arith.constant 0 : index
    %6 = vector.load %arg2[%5, %c0_1, %c0_2] : memref<1x32x128xbf16, #tpu.memory_space<vmem>>, vector<1x32x128xbf16>
    %7 = vector.shape_cast %6 : vector<1x32x128xbf16> to vector<32x128xbf16>
    %cst = arith.constant dense<0.000000e+00> : vector<1x128xf32>
    %8 = tpu.matmul %0, %7, %cst {dimension_numbers = #tpu.dot_dimension_numbers<[1], [0], [0], [1], [0, 0, 1, 1], [], []>} : vector<1x32xbf16>, vector<32x128xbf16>, vector<1x128xf32> -> vector<1x128xf32>
    %9 = arith.addi %1, %c0_i32 : i32
    %10 = arith.index_cast %9 : i32 to index
    %11 = memref.load %arg1[%10] : memref<2xf32, #tpu.memory_space<smem>>
    %12 = vector.broadcast %11 : f32 to vector<1x128xf32>
    %13 = arith.addf %8, %12 : vector<1x128xf32>
    %cst_3 = arith.constant 0xFF800000 : f32
    %14 = vector.broadcast %cst_3 : f32 to vector<1x128xf32>
    %15 = arith.select %4, %13, %14 : vector<1x128xi1>, vector<1x128xf32>
    %cst_4 = arith.constant dense<0xFF800000> : vector<1xf32>
    %16 = vector.multi_reduction <maximumf>, %15, %cst_4 [1] : vector<1x128xf32> to vector<1xf32>
    %17 = vector.shape_cast %16 : vector<1xf32> to vector<1x1xf32>
    %18 = vector.broadcast %17 : vector<1x1xf32> to vector<1x128xf32>
    %19 = arith.subf %15, %18 : vector<1x128xf32>
    %20 = math.exp %19 : vector<1x128xf32>
    %cst_5 = arith.constant dense<0.000000e+00> : vector<1xf32>
    %21 = vector.multi_reduction <add>, %20, %cst_5 [1] : vector<1x128xf32> to vector<1xf32>
    %22 = vector.shape_cast %21 : vector<1xf32> to vector<1x1xf32>
    %23 = tpu.reciprocal %22 {approx = true} : vector<1x1xf32> -> vector<1x1xf32>
    %24 = vector.broadcast %23 : vector<1x1xf32> to vector<1x128xf32>
    %25 = arith.mulf %20, %24 : vector<1x128xf32>
    %26 = arith.truncf %25 : vector<1x128xf32> to vector<1x128xbf16>
    %cst_6 = arith.constant dense<0.000000e+00> : vector<1x32xf32>
    %27 = tpu.matmul %26, %7, %cst_6 {dimension_numbers = #tpu.dot_dimension_numbers<[1], [1], [0], [0], [0, 0, 1, 0], [], []>} : vector<1x128xbf16>, vector<32x128xbf16>, vector<1x32xf32> -> vector<1x32xf32>
    %28 = arith.index_cast %c0_i32 : i32 to index
    %c0_7 = arith.constant 0 : index
    %c0_8 = arith.constant 0 : index
    %29 = vector.load %arg4[%28, %c0_7, %c0_8] : memref<1x1x128xf32, #tpu.memory_space<vmem>>, vector<1x1x128xf32>
    %30 = vector.shape_cast %29 : vector<1x1x128xf32> to vector<1x128xf32>
    %31 = vector.shape_cast %13 : vector<1x128xf32> to vector<1x1x128xf32>
    tpu.vector_store %arg4[%28, %c0_7, %c0_8], %31 {strides = array<i32>} : memref<1x1x128xf32, #tpu.memory_space<vmem>>, vector<1x1x128xf32>,
    %32 = arith.index_cast %c0_i32 : i32 to index
    %c0_9 = arith.constant 0 : index
    %c0_10 = arith.constant 0 : index
    %33 = vector.load %arg5[%32, %c0_9, %c0_10] : memref<1x1x32xf32, #tpu.memory_space<vmem>>, vector<1x1x32xf32>
    %34 = vector.shape_cast %33 : vector<1x1x32xf32> to vector<1x32xf32>
    %35 = vector.shape_cast %27 : vector<1x32xf32> to vector<1x1x32xf32>
    tpu.vector_store %arg5[%32, %c0_9, %c0_10], %35 {strides = array<i32>} : memref<1x1x32xf32, #tpu.memory_space<vmem>>, vector<1x1x32xf32>,
    %c1_i32_11 = arith.constant 1 : i32
    return
  }
  func.func @transform_0(%arg0: i32, %arg1: memref<2xf32, #tpu.memory_space<smem>>) -> (i32, i32, i32) {
    %c0_i32 = arith.constant 0 : i32
    %c0_i32_0 = arith.constant 0 : i32
    %c0_i32_1 = arith.constant 0 : i32
    return %arg0, %c0_i32, %c0_i32_0 : i32, i32, i32
  }
  func.func @transform_1(%arg0: i32, %arg1: memref<2xf32, #tpu.memory_space<smem>>) -> (i32, i32) {
    %c0_i32 = arith.constant 0 : i32
    %c0_i32_0 = arith.constant 0 : i32
    %c0_i32_1 = arith.constant 0 : i32
    return %c0_i32, %c0_i32_0 : i32, i32
  }
  func.func @transform_2(%arg0: i32, %arg1: memref<2xf32, #tpu.memory_space<smem>>) -> (i32, i32, i32) {
    %c0_i32 = arith.constant 0 : i32
    %c0_i32_0 = arith.constant 0 : i32
    %c0_i32_1 = arith.constant 0 : i32
    return %arg0, %c0_i32, %c0_i32_0 : i32, i32, i32
  }
  func.func @transform_3(%arg0: i32, %arg1: memref<2xf32, #tpu.memory_space<smem>>) -> (i32, i32, i32) {
    %c0_i32 = arith.constant 0 : i32
    %c0_i32_0 = arith.constant 0 : i32
    %c0_i32_1 = arith.constant 0 : i32
    return %arg0, %c0_i32, %c0_i32_0 : i32, i32, i32
  }
}

module attributes {stable_mosaic.version = 11 : i64} {
  func.func @_linear_attn_kernel(%arg0: i32, %arg1: memref<2xf32, #tpu.memory_space<smem>>, %arg2: memref<1x32x256xbf16, #tpu.memory_space<vmem>>, %arg3: memref<1x32xbf16, #tpu.memory_space<vmem>>, %arg4: memref<1x1x256xf32, #tpu.memory_space<vmem>>, %arg5: memref<1x1x32xf32, #tpu.memory_space<vmem>>) attributes {dimension_semantics = [#tpu.dimension_semantics<parallel>], iteration_bounds = array<i64: 2>, scalar_prefetch = 1 : i64, scratch_operands = 0 : i64, tpu.core_type = #tpu.core_type<tc>, window_params = [{transform_indices = @transform_0, window_bounds = array<i64: 1, 32, 256>}, {pipeline_mode = #tpu.pipeline_mode<synchronous>, transform_indices = @transform_1, window_bounds = array<i64: 1, 32>}, {transform_indices = @transform_2, window_bounds = array<i64: 1, 1, 256>}, {transform_indices = @transform_3, window_bounds = array<i64: 1, 1, 32>}]} {
    %c0 = arith.constant 0 : index
    %c0_0 = arith.constant 0 : index
    %0 = vector.load %arg3[%c0, %c0_0] : memref<1x32xbf16, #tpu.memory_space<vmem>>, vector<1x32xbf16>
    %c1_i32 = arith.constant 1 : i32
    %1 = arith.muli %arg0, %c1_i32 : i32
    %c0_i32 = arith.constant 0 : i32
    %2 = arith.index_cast %c0_i32 : i32 to index
    %c0_1 = arith.constant 0 : index
    %c0_2 = arith.constant 0 : index
    %3 = vector.load %arg2[%2, %c0_1, %c0_2] : memref<1x32x256xbf16, #tpu.memory_space<vmem>>, vector<1x32x256xbf16>
    %4 = vector.shape_cast %3 : vector<1x32x256xbf16> to vector<32x256xbf16>
    %cst = arith.constant dense<0.000000e+00> : vector<1x256xf32>
    %5 = tpu.matmul %0, %4, %cst {dimension_numbers = #tpu.dot_dimension_numbers<[1], [0], [0], [1], [0, 0, 1, 1], [], []>} : vector<1x32xbf16>, vector<32x256xbf16>, vector<1x256xf32> -> vector<1x256xf32>
    %6 = arith.addi %1, %c0_i32 : i32
    %7 = arith.index_cast %6 : i32 to index
    %8 = memref.load %arg1[%7] : memref<2xf32, #tpu.memory_space<smem>>
    %9 = vector.broadcast %8 : f32 to vector<1x256xf32>
    %10 = arith.addf %5, %9 : vector<1x256xf32>
    %cst_3 = arith.constant dense<0xFF800000> : vector<1xf32>
    %11 = vector.multi_reduction <maximumf>, %10, %cst_3 [1] : vector<1x256xf32> to vector<1xf32>
    %12 = vector.shape_cast %11 : vector<1xf32> to vector<1x1xf32>
    %13 = vector.broadcast %12 : vector<1x1xf32> to vector<1x256xf32>
    %14 = arith.subf %10, %13 : vector<1x256xf32>
    %15 = math.exp %14 : vector<1x256xf32>
    %cst_4 = arith.constant dense<0.000000e+00> : vector<1xf32>
    %16 = vector.multi_reduction <add>, %15, %cst_4 [1] : vector<1x256xf32> to vector<1xf32>
    %17 = vector.shape_cast %16 : vector<1xf32> to vector<1x1xf32>
    %18 = tpu.reciprocal %17 {approx = true} : vector<1x1xf32> -> vector<1x1xf32>
    %19 = vector.broadcast %18 : vector<1x1xf32> to vector<1x256xf32>
    %20 = arith.mulf %15, %19 : vector<1x256xf32>
    %21 = arith.truncf %20 : vector<1x256xf32> to vector<1x256xbf16>
    %cst_5 = arith.constant dense<0.000000e+00> : vector<1x32xf32>
    %22 = tpu.matmul %21, %4, %cst_5 {dimension_numbers = #tpu.dot_dimension_numbers<[1], [1], [0], [0], [0, 0, 1, 0], [], []>} : vector<1x256xbf16>, vector<32x256xbf16>, vector<1x32xf32> -> vector<1x32xf32>
    %23 = arith.index_cast %c0_i32 : i32 to index
    %c0_6 = arith.constant 0 : index
    %c0_7 = arith.constant 0 : index
    %24 = vector.load %arg4[%23, %c0_6, %c0_7] : memref<1x1x256xf32, #tpu.memory_space<vmem>>, vector<1x1x256xf32>
    %25 = vector.shape_cast %24 : vector<1x1x256xf32> to vector<1x256xf32>
    %26 = vector.shape_cast %10 : vector<1x256xf32> to vector<1x1x256xf32>
    tpu.vector_store %arg4[%23, %c0_6, %c0_7], %26 {strides = array<i32>} : memref<1x1x256xf32, #tpu.memory_space<vmem>>, vector<1x1x256xf32>,
    %27 = arith.index_cast %c0_i32 : i32 to index
    %c0_8 = arith.constant 0 : index
    %c0_9 = arith.constant 0 : index
    %28 = vector.load %arg5[%27, %c0_8, %c0_9] : memref<1x1x32xf32, #tpu.memory_space<vmem>>, vector<1x1x32xf32>
    %29 = vector.shape_cast %28 : vector<1x1x32xf32> to vector<1x32xf32>
    %30 = vector.shape_cast %22 : vector<1x32xf32> to vector<1x1x32xf32>
    tpu.vector_store %arg5[%27, %c0_8, %c0_9], %30 {strides = array<i32>} : memref<1x1x32xf32, #tpu.memory_space<vmem>>, vector<1x1x32xf32>,
    %c1_i32_10 = arith.constant 1 : i32
    return
  }
  func.func @transform_0(%arg0: i32, %arg1: memref<2xf32, #tpu.memory_space<smem>>) -> (i32, i32, i32) {
    %c0_i32 = arith.constant 0 : i32
    %c0_i32_0 = arith.constant 0 : i32
    %c0_i32_1 = arith.constant 0 : i32
    return %arg0, %c0_i32, %c0_i32_0 : i32, i32, i32
  }
  func.func @transform_1(%arg0: i32, %arg1: memref<2xf32, #tpu.memory_space<smem>>) -> (i32, i32) {
    %c0_i32 = arith.constant 0 : i32
    %c0_i32_0 = arith.constant 0 : i32
    %c0_i32_1 = arith.constant 0 : i32
    return %c0_i32, %c0_i32_0 : i32, i32
  }
  func.func @transform_2(%arg0: i32, %arg1: memref<2xf32, #tpu.memory_space<smem>>) -> (i32, i32, i32) {
    %c0_i32 = arith.constant 0 : i32
    %c0_i32_0 = arith.constant 0 : i32
    %c0_i32_1 = arith.constant 0 : i32
    return %arg0, %c0_i32, %c0_i32_0 : i32, i32, i32
  }
  func.func @transform_3(%arg0: i32, %arg1: memref<2xf32, #tpu.memory_space<smem>>) -> (i32, i32, i32) {
    %c0_i32 = arith.constant 0 : i32
    %c0_i32_0 = arith.constant 0 : i32
    %c0_i32_1 = arith.constant 0 : i32
    return %arg0, %c0_i32, %c0_i32_0 : i32, i32, i32
  }
}

module attributes {stable_mosaic.version = 11 : i64} {
  func.func @_linear_attn_kernel(%arg0: i32, %arg1: memref<2xf32, #tpu.memory_space<smem>>, %arg2: memref<1x16x1024xbf16, #tpu.memory_space<vmem>>, %arg3: memref<40x16xbf16, #tpu.memory_space<vmem>>, %arg4: memref<1x1x1024xf32, #tpu.memory_space<vmem>>, %arg5: memref<1x1x32xf32, #tpu.memory_space<vmem>>) attributes {dimension_semantics = [#tpu.dimension_semantics<parallel>], iteration_bounds = array<i64: 2>, scalar_prefetch = 1 : i64, scratch_operands = 0 : i64, tpu.core_type = #tpu.core_type<tc>, window_params = [{transform_indices = @transform_0, window_bounds = array<i64: 1, 16, 1024>}, {pipeline_mode = #tpu.pipeline_mode<synchronous>, transform_indices = @transform_1, window_bounds = array<i64: 40, 16>}, {transform_indices = @transform_2, window_bounds = array<i64: 1, 1, 1024>}, {transform_indices = @transform_3, window_bounds = array<i64: 1, 1, 32>}]} {
    %c0 = arith.constant 0 : index
    %c0_0 = arith.constant 0 : index
    %0 = vector.load %arg3[%c0, %c0_0] : memref<40x16xbf16, #tpu.memory_space<vmem>>, vector<40x16xbf16>
    %c1_i32 = arith.constant 1 : i32
    %1 = arith.muli %arg0, %c1_i32 : i32
    %c0_i32 = arith.constant 0 : i32
    %2 = arith.index_cast %c0_i32 : i32 to index
    %c0_1 = arith.constant 0 : index
    %c0_2 = arith.constant 0 : index
    %3 = vector.load %arg2[%2, %c0_1, %c0_2] : memref<1x16x1024xbf16, #tpu.memory_space<vmem>>, vector<1x16x1024xbf16>
    %4 = vector.shape_cast %3 : vector<1x16x1024xbf16> to vector<16x1024xbf16>
    %cst = arith.constant dense<0.000000e+00> : vector<40x1024xf32>
    %5 = tpu.matmul %0, %4, %cst {dimension_numbers = #tpu.dot_dimension_numbers<[1], [0], [0], [1], [0, 0, 1, 1], [], []>} : vector<40x16xbf16>, vector<16x1024xbf16>, vector<40x1024xf32> -> vector<40x1024xf32>
    %6 = vector.extract_strided_slice %5 {offsets = [32, 0], sizes = [1, 1024], strides = [1, 1]} : vector<40x1024xf32> to vector<1x1024xf32>
    %7 = arith.addi %1, %c0_i32 : i32
    %8 = arith.index_cast %7 : i32 to index
    %9 = memref.load %arg1[%8] : memref<2xf32, #tpu.memory_space<smem>>
    %10 = vector.broadcast %9 : f32 to vector<1x1024xf32>
    %11 = arith.addf %6, %10 : vector<1x1024xf32>
    %cst_3 = arith.constant dense<0xFF800000> : vector<1xf32>
    %12 = vector.multi_reduction <maximumf>, %11, %cst_3 [1] : vector<1x1024xf32> to vector<1xf32>
    %13 = vector.shape_cast %12 : vector<1xf32> to vector<1x1xf32>
    %14 = vector.broadcast %13 : vector<1x1xf32> to vector<1x1024xf32>
    %15 = arith.subf %11, %14 : vector<1x1024xf32>
    %16 = math.exp %15 : vector<1x1024xf32>
    %cst_4 = arith.constant dense<0.000000e+00> : vector<1xf32>
    %17 = vector.multi_reduction <add>, %16, %cst_4 [1] : vector<1x1024xf32> to vector<1xf32>
    %18 = vector.shape_cast %17 : vector<1xf32> to vector<1x1xf32>
    %19 = tpu.reciprocal %18 {approx = true} : vector<1x1xf32> -> vector<1x1xf32>
    %20 = vector.broadcast %19 : vector<1x1xf32> to vector<1x1024xf32>
    %21 = arith.mulf %16, %20 : vector<1x1024xf32>
    %cst_5 = arith.constant dense<0.000000e+00> : vector<1x40xf32>
    %22 = tpu.matmul %21, %5, %cst_5 {dimension_numbers = #tpu.dot_dimension_numbers<[1], [1], [0], [0], [0, 0, 1, 0], [], []>} : vector<1x1024xf32>, vector<40x1024xf32>, vector<1x40xf32> -> vector<1x40xf32>
    %23 = arith.index_cast %c0_i32 : i32 to index
    %c0_6 = arith.constant 0 : index
    %c0_7 = arith.constant 0 : index
    %24 = vector.load %arg4[%23, %c0_6, %c0_7] : memref<1x1x1024xf32, #tpu.memory_space<vmem>>, vector<1x1x1024xf32>
    %25 = vector.shape_cast %24 : vector<1x1x1024xf32> to vector<1x1024xf32>
    %26 = vector.shape_cast %11 : vector<1x1024xf32> to vector<1x1x1024xf32>
    tpu.vector_store %arg4[%23, %c0_6, %c0_7], %26 {strides = array<i32>} : memref<1x1x1024xf32, #tpu.memory_space<vmem>>, vector<1x1x1024xf32>,
    %27 = vector.extract_strided_slice %22 {offsets = [0, 0], sizes = [1, 32], strides = [1, 1]} : vector<1x40xf32> to vector<1x32xf32>
    %28 = arith.index_cast %c0_i32 : i32 to index
    %c0_8 = arith.constant 0 : index
    %c0_9 = arith.constant 0 : index
    %29 = vector.load %arg5[%28, %c0_8, %c0_9] : memref<1x1x32xf32, #tpu.memory_space<vmem>>, vector<1x1x32xf32>
    %30 = vector.shape_cast %29 : vector<1x1x32xf32> to vector<1x32xf32>
    %31 = vector.shape_cast %27 : vector<1x32xf32> to vector<1x1x32xf32>
    tpu.vector_store %arg5[%28, %c0_8, %c0_9], %31 {strides = array<i32>} : memref<1x1x32xf32, #tpu.memory_space<vmem>>, vector<1x1x32xf32>,
    %c1_i32_10 = arith.constant 1 : i32
    return
  }
  func.func @transform_0(%arg0: i32, %arg1: memref<2xf32, #tpu.memory_space<smem>>) -> (i32, i32, i32) {
    %c0_i32 = arith.constant 0 : i32
    %c0_i32_0 = arith.constant 0 : i32
    %c0_i32_1 = arith.constant 0 : i32
    return %arg0, %c0_i32, %c0_i32_0 : i32, i32, i32
  }
  func.func @transform_1(%arg0: i32, %arg1: memref<2xf32, #tpu.memory_space<smem>>) -> (i32, i32) {
    %c0_i32 = arith.constant 0 : i32
    %c0_i32_0 = arith.constant 0 : i32
    %c0_i32_1 = arith.constant 0 : i32
    return %c0_i32, %c0_i32_0 : i32, i32
  }
  func.func @transform_2(%arg0: i32, %arg1: memref<2xf32, #tpu.memory_space<smem>>) -> (i32, i32, i32) {
    %c0_i32 = arith.constant 0 : i32
    %c0_i32_0 = arith.constant 0 : i32
    %c0_i32_1 = arith.constant 0 : i32
    return %arg0, %c0_i32, %c0_i32_0 : i32, i32, i32
  }
  func.func @transform_3(%arg0: i32, %arg1: memref<2xf32, #tpu.memory_space<smem>>) -> (i32, i32, i32) {
    %c0_i32 = arith.constant 0 : i32
    %c0_i32_0 = arith.constant 0 : i32
    %c0_i32_1 = arith.constant 0 : i32
    return %arg0, %c0_i32, %c0_i32_0 : i32, i32, i32
  }
}

</mosaic_0001>

<llo_original>
// kernel: reverse
$region0: #{reverse}
  #allocation0 [shape = 's32[1]{0}', space=sflag, size = 0x4, scoped, tag = 'scoped memory for reverse']
  %s0 = inlined_call_operand.vmem [shape: f32[32,32,3,3], index: 0, kind: input, shape index: {}]
  %s1 = inlined_call_operand.vmem [shape: bf16[32,32,3,3], index: 1, kind: output, shape index: {}]
  %s2 = scalar_lea.vmem %s0, 256
  %v3 = vld [vmem:[%s2] sm:$0xff]
  %v4 = vpack.c.bf16 0.0, %v3
  %5 = vst [vmem:[%s1] sm:$0xf] %v4
  %s6 = scalar_lea.vmem %s0, 160
  %v7 = vld [vmem:[%s6] sm:$0xff]
  %s8 = scalar_lea.vmem %s1, 48
  %v9 = vpack.c.bf16 0.0, %v7
  %10 = vst [vmem:[%s8] sm:$0xf] %v9
  %s11 = scalar_lea.vmem %s0, 64
  %v12 = vld [vmem:[%s11] sm:$0xff]
  %s13 = scalar_lea.vmem %s1, 96
  %v14 = vpack.c.bf16 0.0, %v12
  %15 = vst [vmem:[%s13] sm:$0xf] %v14
  %s16 = scalar_lea.vmem %s0, 224
  %v17 = vld [vmem:[%s16] sm:$0xff]
  %s18 = scalar_lea.vmem %s1, 16
  %v19 = vpack.c.bf16 0.0, %v17
  %20 = vst [vmem:[%s18] sm:$0xf] %v19
  %s21 = scalar_lea.vmem %s0, 128
  %v22 = vld [vmem:[%s21] sm:$0xff]
  %s23 = scalar_lea.vmem %s1, 64
  %v24 = vpack.c.bf16 0.0, %v22
  %25 = vst [vmem:[%s23] sm:$0xf] %v24
  %s26 = scalar_lea.vmem %s0, 32
  %v27 = vld [vmem:[%s26] sm:$0xff]
  %s28 = scalar_lea.vmem %s1, 112
  %v29 = vpack.c.bf16 0.0, %v27
  %30 = vst [vmem:[%s28] sm:$0xf] %v29
  %s31 = scalar_lea.vmem %s0, 192
  %v32 = vld [vmem:[%s31] sm:$0xff]
  %s33 = scalar_lea.vmem %s1, 32
  %v34 = vpack.c.bf16 0.0, %v32
  %35 = vst [vmem:[%s33] sm:$0xf] %v34
  %s36 = scalar_lea.vmem %s0, 96
  %v37 = vld [vmem:[%s36] sm:$0xff]
  %s38 = scalar_lea.vmem %s1, 80
  %v39 = vpack.c.bf16 0.0, %v37
  %40 = vst [vmem:[%s38] sm:$0xf] %v39
  %v41 = vld [vmem:[%s0] sm:$0xff]
  %s42 = scalar_lea.vmem %s1, 128
  %v43 = vpack.c.bf16 0.0, %v41
  %44 = vst [vmem:[%s42] sm:$0xf] %v43
  %s45 = scalar_lea.vmem %s0, 264
  %v46 = vld [vmem:[%s45] sm:$0xff]
  %s47 = scalar_lea.vmem %s1, 4
  %v48 = vpack.c.bf16 0.0, %v46
  %49 = vst [vmem:[%s47] sm:$0xf] %v48
  %s50 = scalar_lea.vmem %s0, 168
  %v51 = vld [vmem:[%s50] sm:$0xff]
  %s52 = scalar_lea.vmem %s1, 52
  %v53 = vpack.c.bf16 0.0, %v51
  %54 = vst [vmem:[%s52] sm:$0xf] %v53
  %s55 = scalar_lea.vmem %s0, 72
  %v56 = vld [vmem:[%s55] sm:$0xff]
  %s57 = scalar_lea.vmem %s1, 100
  %v58 = vpack.c.bf16 0.0, %v56
  %59 = vst [vmem:[%s57] sm:$0xf] %v58
  %s60 = scalar_lea.vmem %s0, 232
  %v61 = vld [vmem:[%s60] sm:$0xff]
  %s62 = scalar_lea.vmem %s1, 20
  %v63 = vpack.c.bf16 0.0, %v61
  %64 = vst [vmem:[%s62] sm:$0xf] %v63
  %s65 = scalar_lea.vmem %s0, 136
  %v66 = vld [vmem:[%s65] sm:$0xff]
  %s67 = scalar_lea.vmem %s1, 68
  %v68 = vpack.c.bf16 0.0, %v66
  %69 = vst [vmem:[%s67] sm:$0xf] %v68
  %s70 = scalar_lea.vmem %s0, 40
  %v71 = vld [vmem:[%s70] sm:$0xff]
  %s72 = scalar_lea.vmem %s1, 116
  %v73 = vpack.c.bf16 0.0, %v71
  %74 = vst [vmem:[%s72] sm:$0xf] %v73
  %s75 = scalar_lea.vmem %s0, 200
  %v76 = vld [vmem:[%s75] sm:$0xff]
  %s77 = scalar_lea.vmem %s1, 36
  %v78 = vpack.c.bf16 0.0, %v76
  %79 = vst [vmem:[%s77] sm:$0xf] %v78
  %s80 = scalar_lea.vmem %s0, 104
  %v81 = vld [vmem:[%s80] sm:$0xff]
  %s82 = scalar_lea.vmem %s1, 84
  %v83 = vpack.c.bf16 0.0, %v81
  %84 = vst [vmem:[%s82] sm:$0xf] %v83
  %s85 = scalar_lea.vmem %s0, 8
  %v86 = vld [vmem:[%s85] sm:$0xff]
  %s87 = scalar_lea.vmem %s1, 132
  %v88 = vpack.c.bf16 0.0, %v86
  %89 = vst [vmem:[%s87] sm:$0xf] %v88
  %s90 = scalar_lea.vmem %s0, 272
  %v91 = vld [vmem:[%s90] sm:$0xff]
  %s92 = scalar_lea.vmem %s1, 8
  %v93 = vpack.c.bf16 0.0, %v91
  %94 = vst [vmem:[%s92] sm:$0xf] %v93
  %s95 = scalar_lea.vmem %s0, 176
  %v96 = vld [vmem:[%s95] sm:$0xff]
  %s97 = scalar_lea.vmem %s1, 56
  %v98 = vpack.c.bf16 0.0, %v96
  %99 = vst [vmem:[%s97] sm:$0xf] %v98
  %s100 = scalar_lea.vmem %s0, 80
  %v101 = vld [vmem:[%s100] sm:$0xff]
  %s102 = scalar_lea.vmem %s1, 104
  %v103 = vpack.c.bf16 0.0, %v101
  %104 = vst [vmem:[%s102] sm:$0xf] %v103
  %s105 = scalar_lea.vmem %s0, 240
  %v106 = vld [vmem:[%s105] sm:$0xff]
  %s107 = scalar_lea.vmem %s1, 24
  %v108 = vpack.c.bf16 0.0, %v106
  %109 = vst [vmem:[%s107] sm:$0xf] %v108
  %s110 = scalar_lea.vmem %s0, 144
  %v111 = vld [vmem:[%s110] sm:$0xff]
  %s112 = scalar_lea.vmem %s1, 72
  %v113 = vpack.c.bf16 0.0, %v111
  %114 = vst [vmem:[%s112] sm:$0xf] %v113
  %s115 = scalar_lea.vmem %s0, 48
  %v116 = vld [vmem:[%s115] sm:$0xff]
  %s117 = scalar_lea.vmem %s1, 120
  %v118 = vpack.c.bf16 0.0, %v116
  %119 = vst [vmem:[%s117] sm:$0xf] %v118
  %s120 = scalar_lea.vmem %s0, 208
  %v121 = vld [vmem:[%s120] sm:$0xff]
  %s122 = scalar_lea.vmem %s1, 40
  %v123 = vpack.c.bf16 0.0, %v121
  %124 = vst [vmem:[%s122] sm:$0xf] %v123
  %s125 = scalar_lea.vmem %s0, 112
  %v126 = vld [vmem:[%s125] sm:$0xff]
  %s127 = scalar_lea.vmem %s1, 88
  %v128 = vpack.c.bf16 0.0, %v126
  %129 = vst [vmem:[%s127] sm:$0xf] %v128
  %s130 = scalar_lea.vmem %s0, 16
  %v131 = vld [vmem:[%s130] sm:$0xff]
  %s132 = scalar_lea.vmem %s1, 136
  %v133 = vpack.c.bf16 0.0, %v131
  %134 = vst [vmem:[%s132] sm:$0xf] %v133
  %s135 = scalar_lea.vmem %s0, 280
  %v136 = vld [vmem:[%s135] sm:$0xff]
  %s137 = scalar_lea.vmem %s1, 12
  %v138 = vpack.c.bf16 0.0, %v136
  %139 = vst [vmem:[%s137] sm:$0xf] %v138
  %s140 = scalar_lea.vmem %s0, 184
  %v141 = vld [vmem:[%s140] sm:$0xff]
  %s142 = scalar_lea.vmem %s1, 60
  %v143 = vpack.c.bf16 0.0, %v141
  %144 = vst [vmem:[%s142] sm:$0xf] %v143
  %s145 = scalar_lea.vmem %s0, 88
  %v146 = vld [vmem:[%s145] sm:$0xff]
  %s147 = scalar_lea.vmem %s1, 108
  %v148 = vpack.c.bf16 0.0, %v146
  %149 = vst [vmem:[%s147] sm:$0xf] %v148
  %s150 = scalar_lea.vmem %s0, 248
  %v151 = vld [vmem:[%s150] sm:$0xff]
  %s152 = scalar_lea.vmem %s1, 28
  %v153 = vpack.c.bf16 0.0, %v151
  %154 = vst [vmem:[%s152] sm:$0xf] %v153
  %s155 = scalar_lea.vmem %s0, 152
  %v156 = vld [vmem:[%s155] sm:$0xff]
  %s157 = scalar_lea.vmem %s1, 76
  %v158 = vpack.c.bf16 0.0, %v156
  %159 = vst [vmem:[%s157] sm:$0xf] %v158
  %s160 = scalar_lea.vmem %s0, 56
  %v161 = vld [vmem:[%s160] sm:$0xff]
  %s162 = scalar_lea.vmem %s1, 124
  %v163 = vpack.c.bf16 0.0, %v161
  %164 = vst [vmem:[%s162] sm:$0xf] %v163
  %s165 = scalar_lea.vmem %s0, 216
  %v166 = vld [vmem:[%s165] sm:$0xff]
  %s167 = scalar_lea.vmem %s1, 44
  %v168 = vpack.c.bf16 0.0, %v166
  %169 = vst [vmem:[%s167] sm:$0xf] %v168
  %s170 = scalar_lea.vmem %s0, 120
  %v171 = vld [vmem:[%s170] sm:$0xff]
  %s172 = scalar_lea.vmem %s1, 92
  %v173 = vpack.c.bf16 0.0, %v171
  %174 = vst [vmem:[%s172] sm:$0xf] %v173
  %s175 = scalar_lea.vmem %s0, 24
  %v176 = vld [vmem:[%s175] sm:$0xff]
  %s177 = scalar_lea.vmem %s1, 140
  %v178 = vpack.c.bf16 0.0, %v176
  %179 = vst [vmem:[%s177] sm:$0xf] %v178

// kernel: attn_vgg_before.5
$region0: #{attn_vgg_before.5}
  #allocation0 [shape = 'u32[]', space=smem, size = 0x4, offset = 0x4, fixed_abs, tag = 'smem constant byte address 0x4 - core index']
  #allocation1 [shape = 'u32[144,128]{1,0:T(1,128)}', space=vmem, size = 0x12000, scoped, tag = 'internal scratch']
  #allocation2 [shape = 's32[1]{0}', space=sflag, size = 0x4, scoped, tag = 'scoped memory for attn_vgg_before.5']
  #allocation3 [shape = 'u8[512]{0}', space=smem, size = 0x200, scoped, tag = 'prefetched SMEM operand 0']
  %s0 = inlined_call_operand.vmem [shape: f32[2], index: 0, kind: input, shape index: {}]
  %s1 = inlined_call_operand.vmem [shape: bf16[2,32,128], index: 1, kind: input, shape index: {}]
  %s2 = inlined_call_operand.vmem [shape: bf16[1,32], index: 2, kind: input, shape index: {}]
  %s3 = inlined_call_operand.vmem [shape: f32[2,1,128], index: 3, kind: output, shape index: {0}]
  %s4 = inlined_call_operand.vmem [shape: f32[2,1,32], index: 4, kind: output, shape index: {1}]
  %5 = xla_tuple %s3, %s4
  %s6 = sld [smem:[#allocation0]]
  $region49: #{attn_vgg_before.5} parent=0
    _
  %s8 = ssub.s32 1, %s6
  %s9 = scalar_select 0, %s8, %s6
  %s10 = sshll.u32 %s0, 4
  %s11 = int_to_ptr.vmem [resolvable:$true] %s10
  %13 = dma.vmem_to_smem %s11, 16, [#allocation3], [#allocation2]
  %14 = dma.done [#allocation2], 16
  %15 = sfence
  loop: start=0, step=1, limit=4
  $region2: #{attn_vgg_before.5} parent=0 // loop_pre_header
    _
  $region3: #{attn_vgg_before.5} parent=0 // loop_header
    %s17 = sphi 0, %s21
    %p18 = scmp.ge.s32.totalorder %s17, 4
    %s27 = sphi 0, %s29
    %s30 = sphi 0, %s27
    %s31 = sphi 0, %s30
    %s47 = sphi 0, %s31
    %s51 = sphi 0, %s51
    %s53 = sphi 0, %s51
    %s54 = sphi 0, %s53
    %s68 = sphi 0, %s54
    %s74 = sphi 0, %s76
    %s77 = sphi 0, %s74
    %s78 = sphi 0, %s77
    %s94 = sphi 0, %s78
    %s100 = sphi 0, %s102
    %s103 = sphi 0, %s100
    %s104 = sphi 0, %s103
    %s120 = sphi 0, %s104
  $region4: #{attn_vgg_before.5} parent=0 // loop_header_branch
    %20 = sbr.rel (%p18) target = $region8
  $region5: #{attn_vgg_before.5} parent=0 // loop_body
    %s22 = ssub.s32 %s17, 1
    %s23 = ssub.s32 %s17, 2
    %s24 = sadd.s32 %s17, 1
    %s25 = ssub.s32 %s17, %s24
    %p26 = scmp.eq.s32.totalorder %s25, 0
    %s28 = sadd.s32 %s27, 1
    %s29 = scalar_select %p26, %s27, %s28
    %p32 = pneg %p26
    %p33 = scmp.eq.s32.totalorder %s17, 1
    %p34 = por %p32, %p33
    %p35 = scmp.ne.s32.totalorder %s27, %s30
    %p36 = scmp.eq.s32.totalorder %s17, 0
    %p37 = por %p35, %p36
    %p38 = scmp.ne.s32.totalorder %s27, %s30
    %p39 = scmp.eq.s32.totalorder %s22, 1
    %p40 = por %p38, %p39
    %p41 = scmp.ne.s32.totalorder %s30, %s31
    %p42 = scmp.eq.s32.totalorder %s22, 0
    %p43 = por %p41, %p42
    %p44 = scmp.ne.s32.totalorder %s30, %s31
    %p45 = scmp.eq.s32.totalorder %s23, 1
    %p46 = por %p44, %p45
    %p48 = scmp.ne.s32.totalorder %s31, %s47
    %p49 = scmp.eq.s32.totalorder %s23, 0
    %p50 = por %p48, %p49
    %s52 = sadd.s32 %s51, 1
    %p55 = scmp.eq.s32.totalorder %s17, 1
    %p56 = scmp.ne.s32.totalorder %s51, %s53
    %p57 = scmp.eq.s32.totalorder %s17, 0
    %p58 = por %p56, %p57
    %p59 = scmp.ne.s32.totalorder %s51, %s53
    %p60 = scmp.eq.s32.totalorder %s22, 1
    %p61 = por %p59, %p60
    %p62 = scmp.ne.s32.totalorder %s53, %s54
    %p63 = scmp.eq.s32.totalorder %s22, 0
    %p64 = por %p62, %p63
    %p65 = scmp.ne.s32.totalorder %s53, %s54
    %p66 = scmp.eq.s32.totalorder %s23, 1
    %p67 = por %p65, %p66
    %p69 = scmp.ne.s32.totalorder %s54, %s68
    %p70 = scmp.eq.s32.totalorder %s23, 0
    %p71 = por %p69, %p70
    %s72 = ssub.s32 %s17, %s24
    %p73 = scmp.eq.s32.totalorder %s72, 0
    %s75 = sadd.s32 %s74, 1
    %s76 = scalar_select %p73, %s74, %s75
    %p79 = pneg %p73
    %p80 = scmp.eq.s32.totalorder %s17, 1
    %p81 = por %p79, %p80
    %p82 = scmp.ne.s32.totalorder %s74, %s77
    %p83 = scmp.eq.s32.totalorder %s17, 0
    %p84 = por %p82, %p83
    %p85 = scmp.ne.s32.totalorder %s74, %s77
    %p86 = scmp.eq.s32.totalorder %s22, 1
    %p87 = por %p85, %p86
    %p88 = scmp.ne.s32.totalorder %s77, %s78
    %p89 = scmp.eq.s32.totalorder %s22, 0
    %p90 = por %p88, %p89
    %p91 = scmp.ne.s32.totalorder %s77, %s78
    %p92 = scmp.eq.s32.totalorder %s23, 1
    %p93 = por %p91, %p92
    %p95 = scmp.ne.s32.totalorder %s78, %s94
    %p96 = scmp.eq.s32.totalorder %s23, 0
    %p97 = por %p95, %p96
    %s98 = ssub.s32 %s17, %s24
    %p99 = scmp.eq.s32.totalorder %s98, 0
    %s101 = sadd.s32 %s100, 1
    %s102 = scalar_select %p99, %s100, %s101
    %p105 = pneg %p99
    %p106 = scmp.eq.s32.totalorder %s17, 1
    %p107 = por %p105, %p106
    %p108 = scmp.ne.s32.totalorder %s100, %s103
    %p109 = scmp.eq.s32.totalorder %s17, 0
    %p110 = por %p108, %p109
    %p111 = scmp.ne.s32.totalorder %s100, %s103
    %p112 = scmp.eq.s32.totalorder %s22, 1
    %p113 = por %p111, %p112
    %p114 = scmp.ne.s32.totalorder %s103, %s104
    %p115 = scmp.eq.s32.totalorder %s22, 0
    %p116 = por %p114, %p115
    %p117 = scmp.ne.s32.totalorder %s103, %s104
    %p118 = scmp.eq.s32.totalorder %s23, 1
    %p119 = por %p117, %p118
    %p121 = scmp.ne.s32.totalorder %s104, %s120
    %p122 = scmp.eq.s32.totalorder %s23, 0
    %p123 = por %p121, %p122
    %p124 = scmp.le.s32.totalorder 1, %s17
    %p125 = scmp.lt.s32.totalorder %s17, 3
    %p126 = pnand %p124, %p125
    %p127 = pneg %p126
    // Predicated region
    $region9: #{attn_vgg_before.5} parent=5 // pred_check
      _
    $region10: #{attn_vgg_before.5} parent=5 // pred_check_branch
      %129 = sbr.rel (%p126) target = $region12
    $region11: #{attn_vgg_before.5} parent=5 // pred_region
      %s130 = ssub.s32 %s17, 1
      // Predicated region
      $region13: #{attn_vgg_before.5} parent=11 // pred_check
        %p131 = pneg %p64
      $region14: #{attn_vgg_before.5} parent=11 // pred_check_branch
        %133 = sbr.rel (%p131) target = $region16
      $region15: #{attn_vgg_before.5} parent=11 // pred_region
        _
      $region16: #{attn_vgg_before.5} parent=11 // pred_fallthru
        _
    $region12: #{attn_vgg_before.5} parent=5 // pred_fallthru
      _
    %p134 = scmp.lt.s32.totalorder %s17, 2
    // Predicated region
    $region17: #{attn_vgg_before.5} parent=5 // pred_check
      %p135 = pneg %p134
    $region18: #{attn_vgg_before.5} parent=5 // pred_check_branch
      %137 = sbr.rel (%p135) target = $region20
    $region19: #{attn_vgg_before.5} parent=5 // pred_region
      // Predicated region
      $region21: #{attn_vgg_before.5} parent=19 // pred_check
        %p138 = pneg %p37
      $region22: #{attn_vgg_before.5} parent=19 // pred_check_branch
        %140 = sbr.rel (%p138) target = $region24
      $region23: #{attn_vgg_before.5} parent=19 // pred_region
        %p141 = scmp.lt.s32.totalorder %s17, 1
        %s142 = scalar_select %p141, %s17, 1
        %s143 = smul.addr %s142, 4
        %s144 = smul.addr %s143, 4
        %s145 = scalar_lea.vmem %s1, %s144
      $region24: #{attn_vgg_before.5} parent=19 // pred_fallthru
        _
    $region20: #{attn_vgg_before.5} parent=5 // pred_fallthru
      _
    %p146 = scmp.le.s32.totalorder 1, %s17
    %p147 = scmp.lt.s32.totalorder %s17, 3
    %p148 = pnand %p146, %p147
    %p149 = pneg %p148
    // Predicated region
    $region25: #{attn_vgg_before.5} parent=5 // pred_check
      _
    $region26: #{attn_vgg_before.5} parent=5 // pred_check_branch
      %151 = sbr.rel (%p148) target = $region28
    $region27: #{attn_vgg_before.5} parent=5 // pred_region
      %s152 = ssub.s32 %s17, 1
      %p153 = scmp.lt.s32.totalorder %s22, 1
      %s154 = scalar_select %p153, %s22, 1
      %s155 = smul.addr %s154, 4
      %s156 = smul.addr %s155, 4
      %s157 = scalar_lea.vmem %s1, %s156
      %p158 = pneg %p43
      %p159 = pneg %p40
      %p160 = pneg %p64
      %p161 = pneg %p61
      %p162 = pneg %p90
      %p163 = pneg %p87
      %p164 = scmp.lt.s32.totalorder %s22, 1
      %s165 = scalar_select %p164, %s22, 1
      %s166 = scalar_lea.vmem %s3, %s165
      %p167 = pneg %p116
      %p168 = pneg %p113
      %p169 = scmp.lt.s32.totalorder %s22, 1
      %s170 = scalar_select %p169, %s22, 1
      %s171 = scalar_lea.vmem %s4, %s170
      %p172 = scmp.lt.s32.totalorder %s22, 1
      %s173 = scalar_select %p172, %s22, 1
      %s174 = smul.addr %s173, 4
      %s175 = smul.addr %s174, 4
      %s176 = scalar_lea.vmem %s1, %s175
      %p177 = scmp.lt.s32.totalorder %s22, 1
      %s178 = scalar_select %p177, %s22, 1
      %s179 = scalar_lea.vmem %s3, %s178
      %p180 = scmp.lt.s32.totalorder %s22, 1
      %s181 = scalar_select %p180, %s22, 1
      %s182 = scalar_lea.vmem %s4, %s181
      %v184 = vld [vmem:[%s2] sm:$0x1]
      %v185 = vlaneseq
      %v186 = vand.u32 %v185, 127
      %vm187 = vcmp.lt.s32.totalorder %v186, 64
      %v188 = vld [vmem:[%s176] sm:$0xf]
      %v189 = vld [vmem:[%s176 + $0x4] sm:$0xf]
      %v190 = vld [vmem:[%s176 + $0x8] sm:$0xf]
      %v191 = vld [vmem:[%s176 + $0xc] sm:$0xf]
      %s192 = sld [smem:[#allocation3 + %s22]]
      %v193 = vstv %s192
      %v198 = vunpack.c.l.b16 %v188
      %v199 = vunpack.c.l.b16 %v189
      %v200 = vunpack.c.l.b16 %v190
      %v201 = vunpack.c.l.b16 %v191
      %v202 = vpack.c.b16 %v199, %v198
      %v203 = vpack.c.b16 %v201, %v200
      %vm206 = vcmask 261120
      %v208 = vsel %vm206, %v184, 0
      %210 = vmatprep.subr.bf16.mxu0 0
      %211 = vmatpush1.bf16.msra.mxu0 %v202
      %212 = vmatprep.subr.bf16.mxu0 0
      %213 = vmatpush1.bf16.msra.mxu0 %v203
      %214 = vmatprep.subr.bf16.mxu0 0
      %215 = vmatpush1.bf16.msra.mxu0 0
      %216 = vmatprep.subr.bf16.mxu0 0
      %217 = vmatpush1.bf16.msra.mxu0 0
      %218 = vmatprep.subr.bf16.mxu0 0
      %219 = vmatpush1.bf16.msra.mxu0 0
      %220 = vmatprep.subr.bf16.mxu0 0
      %221 = vmatpush1.bf16.msra.mxu0 0
      %222 = vmatprep.subr.bf16.mxu0 0
      %223 = vmatpush1.bf16.msra.mxu0 0
      %224 = vmatprep.subr.bf16.mxu0 0
      %225 = vmatpush1.bf16.msra.mxu0 0
      %226 = vmatprep.subr.bf16.mxu0 0
      %227 = vmatpush1.bf16.msra.mxu0 0
      %228 = vmatprep.subr.bf16.mxu0 0
      %229 = vmatpush1.bf16.msra.mxu0 0
      %230 = vmatprep.subr.bf16.mxu0 0
      %231 = vmatpush1.bf16.msra.mxu0 0
      %232 = vmatprep.subr.bf16.mxu0 0
      %233 = vmatpush1.bf16.msra.mxu0 0
      %234 = vmatprep.subr.bf16.mxu0 0
      %235 = vmatpush1.bf16.msra.mxu0 0
      %236 = vmatprep.subr.bf16.mxu0 0
      %237 = vmatpush1.bf16.msra.mxu0 0
      %238 = vmatprep.subr.bf16.mxu0 0
      %239 = vmatpush1.bf16.msra.mxu0 0
      %240 = vmatprep.subr.bf16.mxu0 0
      %241 = vmatpush1.bf16.msra.mxu0 0
      %242 = vmatprep.mubr.bf16.mxu0 0
      %243 = vmatmul.mubr.bf16.gmra.mrb[0].mxu0 %v208
      %v244 = vpop.f32.mrb[0].mxu0
      %v245 = vadd.f32 %v193, %v244
      %v246 = vpop.f32.mrb[0].mxu0
      %v247 = vpop.f32.mrb[0].mxu0
      %v248 = vpop.f32.mrb[0].mxu0
      %249 = vdwg.mxu0
      %v250 = vsel %vm187, %v245, -inf
      %vm251 = vcmask 1040384
      %v252 = vsel %vm251, %v250, -inf
      %253 = vmax.xlane.f32.xlu0 %v252
      %v254 = vpop.xlane.xlu0 %253
      %v255 = vsub.f32 %v250, %v254
      %v256 = vmul.f32 %v255, 1.442695
      %v257 = vpow.pop %v256
      %v258 = vsel %vm251, %v257, 0.0
      %259 = vadd.xlane.f32.xlu0 %v258
      %v260 = vpop.xlane.xlu0 %259
      %v261 = vrcp.pop %v260
      %v262 = vmul.f32 %v257, %v261
      %v263 = vpack.c.bf16 %v262, %v262
      %264 = vmatprep.subr.bf16.mxu0 0
      %265 = vmatpush1.bf16.xpose.msra.mxu0 %v202
      %266 = vmatprep.subr.bf16.mxu0 0
      %267 = vmatpush1.bf16.xpose.msra.mxu0 %v203
      %268 = vmatprep.subr.bf16.mxu0 0
      %269 = vmatpush1.bf16.xpose.msra.mxu0 0
      %270 = vmatprep.subr.bf16.mxu0 0
      %271 = vmatpush1.bf16.xpose.msra.mxu0 0
      %272 = vmatprep.subr.bf16.mxu0 0
      %273 = vmatpush1.bf16.xpose.msra.mxu0 0
      %274 = vmatprep.subr.bf16.mxu0 0
      %275 = vmatpush1.bf16.xpose.msra.mxu0 0
      %276 = vmatprep.subr.bf16.mxu0 0
      %277 = vmatpush1.bf16.xpose.msra.mxu0 0
      %278 = vmatprep.subr.bf16.mxu0 0
      %279 = vmatpush1.bf16.xpose.msra.mxu0 0
      %280 = vmatprep.subr.bf16.mxu0 0
      %281 = vmatpush1.bf16.xpose.msra.mxu0 0
      %282 = vmatprep.subr.bf16.mxu0 0
      %283 = vmatpush1.bf16.xpose.msra.mxu0 0
      %284 = vmatprep.subr.bf16.mxu0 0
      %285 = vmatpush1.bf16.xpose.msra.mxu0 0
      %286 = vmatprep.subr.bf16.mxu0 0
      %287 = vmatpush1.bf16.xpose.msra.mxu0 0
      %288 = vmatprep.subr.bf16.mxu0 0
      %289 = vmatpush1.bf16.xpose.msra.mxu0 0
      %290 = vmatprep.subr.bf16.mxu0 0
      %291 = vmatpush1.bf16.xpose.msra.mxu0 0
      %292 = vmatprep.subr.bf16.mxu0 0
      %293 = vmatpush1.bf16.xpose.msra.mxu0 0
      %294 = vmatprep.subr.bf16.mxu0 0
      %295 = vmatpush1.bf16.xpose.msra.mxu0 0
      %296 = vmatprep.mubr.bf16.mxu0 0
      %297 = vmatmul.mubr.bf16.gmra.mrb[0].mxu0 %v263
      %v298 = vpop.f32.mrb[0].mxu0
      %v299 = vadd.f32 0.0, %v298
      %v300 = vpop.f32.mrb[0].mxu0
      %v301 = vpop.f32.mrb[0].mxu0
      %v302 = vpop.f32.mrb[0].mxu0
      %303 = vdwg.mxu0
      %304 = vst [vmem:[%s179] sm:$0x1] %v245
      %vm305 = vcmask 253952
      %306 = vst.msk [vmem:[%s182] sm:$0x1] %vm305, %v299
      %p307 = scmp.lt.s32.totalorder %s22, 1
      %s308 = scalar_select %p307, %s22, 1
      %s309 = scalar_lea.vmem %s3, %s308
      %p310 = scmp.lt.s32.totalorder %s22, 1
      %s311 = scalar_select %p310, %s22, 1
      %s312 = scalar_lea.vmem %s4, %s311
      // Predicated region
      $region29: #{attn_vgg_before.5} parent=27 // pred_check
        %p313 = pneg %p87
      $region30: #{attn_vgg_before.5} parent=27 // pred_check_branch
        %315 = sbr.rel (%p313) target = $region32
      $region31: #{attn_vgg_before.5} parent=27 // pred_region
        _
      $region32: #{attn_vgg_before.5} parent=27 // pred_fallthru
        _
      // Predicated region
      $region33: #{attn_vgg_before.5} parent=27 // pred_check
        %p316 = pneg %p113
      $region34: #{attn_vgg_before.5} parent=27 // pred_check_branch
        %318 = sbr.rel (%p316) target = $region36
      $region35: #{attn_vgg_before.5} parent=27 // pred_region
        _
      $region36: #{attn_vgg_before.5} parent=27 // pred_fallthru
        _
    $region28: #{attn_vgg_before.5} parent=5 // pred_fallthru
      _
    %p319 = scmp.le.s32.totalorder 2, %s17
    // Predicated region
    $region37: #{attn_vgg_before.5} parent=5 // pred_check
      %p320 = pneg %p319
    $region38: #{attn_vgg_before.5} parent=5 // pred_check_branch
      %322 = sbr.rel (%p320) target = $region40
    $region39: #{attn_vgg_before.5} parent=5 // pred_region
      %s323 = ssub.s32 %s17, 2
      // Predicated region
      $region41: #{attn_vgg_before.5} parent=39 // pred_check
        %p324 = pneg %p93
      $region42: #{attn_vgg_before.5} parent=39 // pred_check_branch
        %326 = sbr.rel (%p324) target = $region44
      $region43: #{attn_vgg_before.5} parent=39 // pred_region
        %p327 = scmp.lt.s32.totalorder %s23, 1
        %s328 = scalar_select %p327, %s23, 1
        %s329 = scalar_lea.vmem %s3, %s328
      $region44: #{attn_vgg_before.5} parent=39 // pred_fallthru
        _
      // Predicated region
      $region45: #{attn_vgg_before.5} parent=39 // pred_check
        %p330 = pneg %p119
      $region46: #{attn_vgg_before.5} parent=39 // pred_check_branch
        %332 = sbr.rel (%p330) target = $region48
      $region47: #{attn_vgg_before.5} parent=39 // pred_region
        %p333 = scmp.lt.s32.totalorder %s23, 1
        %s334 = scalar_select %p333, %s23, 1
        %s335 = scalar_lea.vmem %s4, %s334
      $region48: #{attn_vgg_before.5} parent=39 // pred_fallthru
        _
    $region40: #{attn_vgg_before.5} parent=5 // pred_fallthru
      _
  $region6: #{attn_vgg_before.5} parent=0 // loop_footer
    %s21 = sadd.s32 1, %s17
  $region7: #{attn_vgg_before.5} parent=0 // loop_footer_branch
    %16 = sbr.rel target = $region3
  $region8: #{attn_vgg_before.5} parent=0 // loop_exit
    _

// kernel: attn_vgg_before.4
$region0: #{attn_vgg_before.4}
  #allocation0 [shape = 'u32[]', space=smem, size = 0x4, offset = 0x4, fixed_abs, tag = 'smem constant byte address 0x4 - core index']
  #allocation1 [shape = 'u32[144,128]{1,0:T(1,128)}', space=vmem, size = 0x12000, scoped, tag = 'internal scratch']
  #allocation2 [shape = 's32[1]{0}', space=sflag, size = 0x4, scoped, tag = 'scoped memory for attn_vgg_before.4']
  #allocation3 [shape = 'u8[512]{0}', space=smem, size = 0x200, scoped, tag = 'prefetched SMEM operand 0']
  %s0 = inlined_call_operand.vmem [shape: f32[2], index: 0, kind: input, shape index: {}]
  %s1 = inlined_call_operand.vmem [shape: bf16[2,32,256], index: 1, kind: input, shape index: {}]
  %s2 = inlined_call_operand.vmem [shape: bf16[1,32], index: 2, kind: input, shape index: {}]
  %s3 = inlined_call_operand.vmem [shape: f32[2,1,256], index: 3, kind: output, shape index: {0}]
  %s4 = inlined_call_operand.vmem [shape: f32[2,1,32], index: 4, kind: output, shape index: {1}]
  %5 = xla_tuple %s3, %s4
  %s6 = sld [smem:[#allocation0]]
  $region49: #{attn_vgg_before.4} parent=0
    _
  %s8 = ssub.s32 1, %s6
  %s9 = scalar_select 0, %s8, %s6
  %s10 = sshll.u32 %s0, 4
  %s11 = int_to_ptr.vmem [resolvable:$true] %s10
  %13 = dma.vmem_to_smem %s11, 16, [#allocation3], [#allocation2]
  %14 = dma.done [#allocation2], 16
  %15 = sfence
  loop: start=0, step=1, limit=4
  $region2: #{attn_vgg_before.4} parent=0 // loop_pre_header
    _
  $region3: #{attn_vgg_before.4} parent=0 // loop_header
    %s17 = sphi 0, %s21
    %p18 = scmp.ge.s32.totalorder %s17, 4
    %s27 = sphi 0, %s29
    %s30 = sphi 0, %s27
    %s31 = sphi 0, %s30
    %s47 = sphi 0, %s31
    %s51 = sphi 0, %s51
    %s53 = sphi 0, %s51
    %s54 = sphi 0, %s53
    %s68 = sphi 0, %s54
    %s74 = sphi 0, %s76
    %s77 = sphi 0, %s74
    %s78 = sphi 0, %s77
    %s94 = sphi 0, %s78
    %s100 = sphi 0, %s102
    %s103 = sphi 0, %s100
    %s104 = sphi 0, %s103
    %s120 = sphi 0, %s104
  $region4: #{attn_vgg_before.4} parent=0 // loop_header_branch
    %20 = sbr.rel (%p18) target = $region8
  $region5: #{attn_vgg_before.4} parent=0 // loop_body
    %s22 = ssub.s32 %s17, 1
    %s23 = ssub.s32 %s17, 2
    %s24 = sadd.s32 %s17, 1
    %s25 = ssub.s32 %s17, %s24
    %p26 = scmp.eq.s32.totalorder %s25, 0
    %s28 = sadd.s32 %s27, 1
    %s29 = scalar_select %p26, %s27, %s28
    %p32 = pneg %p26
    %p33 = scmp.eq.s32.totalorder %s17, 1
    %p34 = por %p32, %p33
    %p35 = scmp.ne.s32.totalorder %s27, %s30
    %p36 = scmp.eq.s32.totalorder %s17, 0
    %p37 = por %p35, %p36
    %p38 = scmp.ne.s32.totalorder %s27, %s30
    %p39 = scmp.eq.s32.totalorder %s22, 1
    %p40 = por %p38, %p39
    %p41 = scmp.ne.s32.totalorder %s30, %s31
    %p42 = scmp.eq.s32.totalorder %s22, 0
    %p43 = por %p41, %p42
    %p44 = scmp.ne.s32.totalorder %s30, %s31
    %p45 = scmp.eq.s32.totalorder %s23, 1
    %p46 = por %p44, %p45
    %p48 = scmp.ne.s32.totalorder %s31, %s47
    %p49 = scmp.eq.s32.totalorder %s23, 0
    %p50 = por %p48, %p49
    %s52 = sadd.s32 %s51, 1
    %p55 = scmp.eq.s32.totalorder %s17, 1
    %p56 = scmp.ne.s32.totalorder %s51, %s53
    %p57 = scmp.eq.s32.totalorder %s17, 0
    %p58 = por %p56, %p57
    %p59 = scmp.ne.s32.totalorder %s51, %s53
    %p60 = scmp.eq.s32.totalorder %s22, 1
    %p61 = por %p59, %p60
    %p62 = scmp.ne.s32.totalorder %s53, %s54
    %p63 = scmp.eq.s32.totalorder %s22, 0
    %p64 = por %p62, %p63
    %p65 = scmp.ne.s32.totalorder %s53, %s54
    %p66 = scmp.eq.s32.totalorder %s23, 1
    %p67 = por %p65, %p66
    %p69 = scmp.ne.s32.totalorder %s54, %s68
    %p70 = scmp.eq.s32.totalorder %s23, 0
    %p71 = por %p69, %p70
    %s72 = ssub.s32 %s17, %s24
    %p73 = scmp.eq.s32.totalorder %s72, 0
    %s75 = sadd.s32 %s74, 1
    %s76 = scalar_select %p73, %s74, %s75
    %p79 = pneg %p73
    %p80 = scmp.eq.s32.totalorder %s17, 1
    %p81 = por %p79, %p80
    %p82 = scmp.ne.s32.totalorder %s74, %s77
    %p83 = scmp.eq.s32.totalorder %s17, 0
    %p84 = por %p82, %p83
    %p85 = scmp.ne.s32.totalorder %s74, %s77
    %p86 = scmp.eq.s32.totalorder %s22, 1
    %p87 = por %p85, %p86
    %p88 = scmp.ne.s32.totalorder %s77, %s78
    %p89 = scmp.eq.s32.totalorder %s22, 0
    %p90 = por %p88, %p89
    %p91 = scmp.ne.s32.totalorder %s77, %s78
    %p92 = scmp.eq.s32.totalorder %s23, 1
    %p93 = por %p91, %p92
    %p95 = scmp.ne.s32.totalorder %s78, %s94
    %p96 = scmp.eq.s32.totalorder %s23, 0
    %p97 = por %p95, %p96
    %s98 = ssub.s32 %s17, %s24
    %p99 = scmp.eq.s32.totalorder %s98, 0
    %s101 = sadd.s32 %s100, 1
    %s102 = scalar_select %p99, %s100, %s101
    %p105 = pneg %p99
    %p106 = scmp.eq.s32.totalorder %s17, 1
    %p107 = por %p105, %p106
    %p108 = scmp.ne.s32.totalorder %s100, %s103
    %p109 = scmp.eq.s32.totalorder %s17, 0
    %p110 = por %p108, %p109
    %p111 = scmp.ne.s32.totalorder %s100, %s103
    %p112 = scmp.eq.s32.totalorder %s22, 1
    %p113 = por %p111, %p112
    %p114 = scmp.ne.s32.totalorder %s103, %s104
    %p115 = scmp.eq.s32.totalorder %s22, 0
    %p116 = por %p114, %p115
    %p117 = scmp.ne.s32.totalorder %s103, %s104
    %p118 = scmp.eq.s32.totalorder %s23, 1
    %p119 = por %p117, %p118
    %p121 = scmp.ne.s32.totalorder %s104, %s120
    %p122 = scmp.eq.s32.totalorder %s23, 0
    %p123 = por %p121, %p122
    %p124 = scmp.le.s32.totalorder 1, %s17
    %p125 = scmp.lt.s32.totalorder %s17, 3
    %p126 = pnand %p124, %p125
    %p127 = pneg %p126
    // Predicated region
    $region9: #{attn_vgg_before.4} parent=5 // pred_check
      _
    $region10: #{attn_vgg_before.4} parent=5 // pred_check_branch
      %129 = sbr.rel (%p126) target = $region12
    $region11: #{attn_vgg_before.4} parent=5 // pred_region
      %s130 = ssub.s32 %s17, 1
      // Predicated region
      $region13: #{attn_vgg_before.4} parent=11 // pred_check
        %p131 = pneg %p64
      $region14: #{attn_vgg_before.4} parent=11 // pred_check_branch
        %133 = sbr.rel (%p131) target = $region16
      $region15: #{attn_vgg_before.4} parent=11 // pred_region
        _
      $region16: #{attn_vgg_before.4} parent=11 // pred_fallthru
        _
    $region12: #{attn_vgg_before.4} parent=5 // pred_fallthru
      _
    %p134 = scmp.lt.s32.totalorder %s17, 2
    // Predicated region
    $region17: #{attn_vgg_before.4} parent=5 // pred_check
      %p135 = pneg %p134
    $region18: #{attn_vgg_before.4} parent=5 // pred_check_branch
      %137 = sbr.rel (%p135) target = $region20
    $region19: #{attn_vgg_before.4} parent=5 // pred_region
      // Predicated region
      $region21: #{attn_vgg_before.4} parent=19 // pred_check
        %p138 = pneg %p37
      $region22: #{attn_vgg_before.4} parent=19 // pred_check_branch
        %140 = sbr.rel (%p138) target = $region24
      $region23: #{attn_vgg_before.4} parent=19 // pred_region
        %p141 = scmp.lt.s32.totalorder %s17, 1
        %s142 = scalar_select %p141, %s17, 1
        %s143 = smul.addr %s142, 8
        %s144 = smul.addr %s143, 4
        %s145 = scalar_lea.vmem %s1, %s144
      $region24: #{attn_vgg_before.4} parent=19 // pred_fallthru
        _
    $region20: #{attn_vgg_before.4} parent=5 // pred_fallthru
      _
    %p146 = scmp.le.s32.totalorder 1, %s17
    %p147 = scmp.lt.s32.totalorder %s17, 3
    %p148 = pnand %p146, %p147
    %p149 = pneg %p148
    // Predicated region
    $region25: #{attn_vgg_before.4} parent=5 // pred_check
      _
    $region26: #{attn_vgg_before.4} parent=5 // pred_check_branch
      %151 = sbr.rel (%p148) target = $region28
    $region27: #{attn_vgg_before.4} parent=5 // pred_region
      %s152 = ssub.s32 %s17, 1
      %p153 = scmp.lt.s32.totalorder %s22, 1
      %s154 = scalar_select %p153, %s22, 1
      %s155 = smul.addr %s154, 8
      %s156 = smul.addr %s155, 4
      %s157 = scalar_lea.vmem %s1, %s156
      %p158 = pneg %p43
      %p159 = pneg %p40
      %p160 = pneg %p64
      %p161 = pneg %p61
      %p162 = pneg %p90
      %p163 = pneg %p87
      %p164 = scmp.lt.s32.totalorder %s22, 1
      %s165 = scalar_select %p164, %s22, 1
      %s166 = smul.addr %s165, 2
      %s167 = scalar_lea.vmem %s3, %s166
      %p168 = pneg %p116
      %p169 = pneg %p113
      %p170 = scmp.lt.s32.totalorder %s22, 1
      %s171 = scalar_select %p170, %s22, 1
      %s172 = scalar_lea.vmem %s4, %s171
      %p173 = scmp.lt.s32.totalorder %s22, 1
      %s174 = scalar_select %p173, %s22, 1
      %s175 = smul.addr %s174, 8
      %s176 = smul.addr %s175, 4
      %s177 = scalar_lea.vmem %s1, %s176
      %p178 = scmp.lt.s32.totalorder %s22, 1
      %s179 = scalar_select %p178, %s22, 1
      %s180 = smul.addr %s179, 2
      %s181 = scalar_lea.vmem %s3, %s180
      %p182 = scmp.lt.s32.totalorder %s22, 1
      %s183 = scalar_select %p182, %s22, 1
      %s184 = scalar_lea.vmem %s4, %s183
      %v186 = vld [vmem:[%s2] sm:$0x1]
      %v187 = vld [vmem:[%s177] sm:$0xff]
      %v188 = vld [vmem:[%s177 + $0x8] sm:$0xff]
      %v189 = vld [vmem:[%s177 + $0x10] sm:$0xff]
      %v190 = vld [vmem:[%s177 + $0x18] sm:$0xff]
      %s191 = sld [smem:[#allocation3 + %s22]]
      %v192 = vstv %s191
      %v197 = vunpack.c.l.b16 %v187
      %v198 = vunpack.c.h.b16 %v187
      %v199 = vunpack.c.l.b16 %v188
      %v200 = vunpack.c.h.b16 %v188
      %v201 = vunpack.c.l.b16 %v189
      %v202 = vunpack.c.h.b16 %v189
      %v203 = vunpack.c.l.b16 %v190
      %v204 = vunpack.c.h.b16 %v190
      %v205 = vpack.c.b16 %v199, %v197
      %v206 = vpack.c.b16 %v200, %v198
      %v207 = vpack.c.b16 %v203, %v201
      %v208 = vpack.c.b16 %v204, %v202
      %vm213 = vcmask 261120
      %v215 = vsel %vm213, %v186, 0
      %217 = vmatprep.subr.bf16.mxu0 %v206
      %218 = vmatpush1.bf16.msra.mxu0 %v205
      %219 = vmatprep.subr.bf16.mxu0 %v208
      %220 = vmatpush1.bf16.msra.mxu0 %v207
      %221 = vmatprep.subr.bf16.mxu0 0
      %222 = vmatpush1.bf16.msra.mxu0 0
      %223 = vmatprep.subr.bf16.mxu0 0
      %224 = vmatpush1.bf16.msra.mxu0 0
      %225 = vmatprep.subr.bf16.mxu0 0
      %226 = vmatpush1.bf16.msra.mxu0 0
      %227 = vmatprep.subr.bf16.mxu0 0
      %228 = vmatpush1.bf16.msra.mxu0 0
      %229 = vmatprep.subr.bf16.mxu0 0
      %230 = vmatpush1.bf16.msra.mxu0 0
      %231 = vmatprep.subr.bf16.mxu0 0
      %232 = vmatpush1.bf16.msra.mxu0 0
      %233 = vmatprep.subr.bf16.mxu0 0
      %234 = vmatpush1.bf16.msra.mxu0 0
      %235 = vmatprep.subr.bf16.mxu0 0
      %236 = vmatpush1.bf16.msra.mxu0 0
      %237 = vmatprep.subr.bf16.mxu0 0
      %238 = vmatpush1.bf16.msra.mxu0 0
      %239 = vmatprep.subr.bf16.mxu0 0
      %240 = vmatpush1.bf16.msra.mxu0 0
      %241 = vmatprep.subr.bf16.mxu0 0
      %242 = vmatpush1.bf16.msra.mxu0 0
      %243 = vmatprep.subr.bf16.mxu0 0
      %244 = vmatpush1.bf16.msra.mxu0 0
      %245 = vmatprep.subr.bf16.mxu0 0
      %246 = vmatpush1.bf16.msra.mxu0 0
      %247 = vmatprep.subr.bf16.mxu0 0
      %248 = vmatpush1.bf16.msra.mxu0 0
      %249 = vmatprep.mubr.bf16.mxu0 0
      %250 = vmatmul.mubr.bf16.gmra.mrb[0].mxu0 %v215
      %v251 = vpop.f32.mrb[0].mxu0
      %v252 = vadd.f32 %v192, %v251
      %v253 = vpop.f32.mrb[0].mxu0
      %v254 = vadd.f32 %v192, %v253
      %v255 = vpop.f32.mrb[0].mxu0
      %v256 = vpop.f32.mrb[0].mxu0
      %257 = vdwg.mxu0
      %vm258 = vcmask 1040384
      %v259 = vsel %vm258, %v252, -inf
      %v260 = vsel %vm258, %v254, -inf
      %v261 = vmax.f32 %v259, %v260
      %262 = vmax.xlane.f32.xlu0 %v261
      %v263 = vpop.xlane.xlu0 %262
      %v264 = vsub.f32 %v252, %v263
      %v265 = vsub.f32 %v254, %v263
      %v266 = vmul.f32 %v264, 1.442695
      %v267 = vpow.pop %v266
      %v268 = vmul.f32 %v265, 1.442695
      %v269 = vpow.pop %v268
      %v270 = vsel %vm258, %v267, 0.0
      %v271 = vsel %vm258, %v269, 0.0
      %v272 = vadd.f32 %v270, %v271
      %273 = vadd.xlane.f32.xlu0 %v272
      %v274 = vpop.xlane.xlu0 %273
      %v275 = vrcp.pop %v274
      %v276 = vmul.f32 %v267, %v275
      %v277 = vmul.f32 %v269, %v275
      %v278 = vpack.c.bf16 %v276, %v276
      %v279 = vpack.c.bf16 %v277, %v277
      %280 = vmatprep.subr.bf16.mxu0 %v206
      %281 = vmatpush1.bf16.xpose.msra.mxu0 %v205
      %282 = vmatprep.subr.bf16.mxu0 %v208
      %283 = vmatpush1.bf16.xpose.msra.mxu0 %v207
      %284 = vmatprep.subr.bf16.mxu0 0
      %285 = vmatpush1.bf16.xpose.msra.mxu0 0
      %286 = vmatprep.subr.bf16.mxu0 0
      %287 = vmatpush1.bf16.xpose.msra.mxu0 0
      %288 = vmatprep.subr.bf16.mxu0 0
      %289 = vmatpush1.bf16.xpose.msra.mxu0 0
      %290 = vmatprep.subr.bf16.mxu0 0
      %291 = vmatpush1.bf16.xpose.msra.mxu0 0
      %292 = vmatprep.subr.bf16.mxu0 0
      %293 = vmatpush1.bf16.xpose.msra.mxu0 0
      %294 = vmatprep.subr.bf16.mxu0 0
      %295 = vmatpush1.bf16.xpose.msra.mxu0 0
      %296 = vmatprep.subr.bf16.mxu0 0
      %297 = vmatpush1.bf16.xpose.msra.mxu0 0
      %298 = vmatprep.subr.bf16.mxu0 0
      %299 = vmatpush1.bf16.xpose.msra.mxu0 0
      %300 = vmatprep.subr.bf16.mxu0 0
      %301 = vmatpush1.bf16.xpose.msra.mxu0 0
      %302 = vmatprep.subr.bf16.mxu0 0
      %303 = vmatpush1.bf16.xpose.msra.mxu0 0
      %304 = vmatprep.subr.bf16.mxu0 0
      %305 = vmatpush1.bf16.xpose.msra.mxu0 0
      %306 = vmatprep.subr.bf16.mxu0 0
      %307 = vmatpush1.bf16.xpose.msra.mxu0 0
      %308 = vmatprep.subr.bf16.mxu0 0
      %309 = vmatpush1.bf16.xpose.msra.mxu0 0
      %310 = vmatprep.subr.bf16.mxu0 0
      %311 = vmatpush1.bf16.xpose.msra.mxu0 0
      %312 = vmatprep.mubr.bf16.mxu0 %v279
      %313 = vmatmul.mubr.bf16.gmra.mrb[0].mxu0 %v278
      %v314 = vpop.f32.mrb[0].mxu0
      %v315 = vadd.f32 0.0, %v314
      %v316 = vpop.f32.mrb[0].mxu0
      %v317 = vpop.f32.mrb[0].mxu0
      %v318 = vpop.f32.mrb[0].mxu0
      %319 = vdwg.mxu0
      %v322 = vcombine.low %v252, %v254
      %v324 = vunpack.c.l.s4 1966171168
      %v325 = vunpack.c.0.s8 %v324
      %v326 = vlaneseq
      %v327 = vshrl.u32 %v326, 7
      %v328 = vsub.s32 %v325, %v327
      %v329 = vrot.slane %v322, %v328
      %v331 = vunpack.c.l.s4 1966171168
      %v332 = vunpack.c.0.s8 %v331
      %v333 = vlaneseq
      %v334 = vshrl.u32 %v333, 7
      %v335 = vsub.s32 %v332, %v334
      %v336 = vrot.slane %v329, %v335
      %v338 = vlaneseq
      %vm339 = vcmp.ge.s32.totalorder %v338, 0
      %vm340 = vcmp.lt.s32.totalorder %v338, 256
      %vm341 = vmand %vm339, %vm340
      %342 = vst.msk [vmem:[%s181] sm:$0x3] %vm341, %v336
      %vm343 = vcmask 253952
      %344 = vst.msk [vmem:[%s184] sm:$0x1] %vm343, %v315
      %p345 = scmp.lt.s32.totalorder %s22, 1
      %s346 = scalar_select %p345, %s22, 1
      %s347 = smul.addr %s346, 2
      %s348 = scalar_lea.vmem %s3, %s347
      %p349 = scmp.lt.s32.totalorder %s22, 1
      %s350 = scalar_select %p349, %s22, 1
      %s351 = scalar_lea.vmem %s4, %s350
      // Predicated region
      $region29: #{attn_vgg_before.4} parent=27 // pred_check
        %p352 = pneg %p87
      $region30: #{attn_vgg_before.4} parent=27 // pred_check_branch
        %354 = sbr.rel (%p352) target = $region32
      $region31: #{attn_vgg_before.4} parent=27 // pred_region
        _
      $region32: #{attn_vgg_before.4} parent=27 // pred_fallthru
        _
      // Predicated region
      $region33: #{attn_vgg_before.4} parent=27 // pred_check
        %p355 = pneg %p113
      $region34: #{attn_vgg_before.4} parent=27 // pred_check_branch
        %357 = sbr.rel (%p355) target = $region36
      $region35: #{attn_vgg_before.4} parent=27 // pred_region
        _
      $region36: #{attn_vgg_before.4} parent=27 // pred_fallthru
        _
    $region28: #{attn_vgg_before.4} parent=5 // pred_fallthru
      _
    %p358 = scmp.le.s32.totalorder 2, %s17
    // Predicated region
    $region37: #{attn_vgg_before.4} parent=5 // pred_check
      %p359 = pneg %p358
    $region38: #{attn_vgg_before.4} parent=5 // pred_check_branch
      %361 = sbr.rel (%p359) target = $region40
    $region39: #{attn_vgg_before.4} parent=5 // pred_region
      %s362 = ssub.s32 %s17, 2
      // Predicated region
      $region41: #{attn_vgg_before.4} parent=39 // pred_check
        %p363 = pneg %p93
      $region42: #{attn_vgg_before.4} parent=39 // pred_check_branch
        %365 = sbr.rel (%p363) target = $region44
      $region43: #{attn_vgg_before.4} parent=39 // pred_region
        %p366 = scmp.lt.s32.totalorder %s23, 1
        %s367 = scalar_select %p366, %s23, 1
        %s368 = smul.addr %s367, 2
        %s369 = scalar_lea.vmem %s3, %s368
      $region44: #{attn_vgg_before.4} parent=39 // pred_fallthru
        _
      // Predicated region
      $region45: #{attn_vgg_before.4} parent=39 // pred_check
        %p370 = pneg %p119
      $region46: #{attn_vgg_before.4} parent=39 // pred_check_branch
        %372 = sbr.rel (%p370) target = $region48
      $region47: #{attn_vgg_before.4} parent=39 // pred_region
        %p373 = scmp.lt.s32.totalorder %s23, 1
        %s374 = scalar_select %p373, %s23, 1
        %s375 = scalar_lea.vmem %s4, %s374
      $region48: #{attn_vgg_before.4} parent=39 // pred_fallthru
        _
    $region40: #{attn_vgg_before.4} parent=5 // pred_fallthru
      _
  $region6: #{attn_vgg_before.4} parent=0 // loop_footer
    %s21 = sadd.s32 1, %s17
  $region7: #{attn_vgg_before.4} parent=0 // loop_footer_branch
    %16 = sbr.rel target = $region3
  $region8: #{attn_vgg_before.4} parent=0 // loop_exit
    _

// kernel: attn_vgg_before.3
$region0: #{attn_vgg_before.3}
  #allocation0 [shape = 'u32[]', space=smem, size = 0x4, offset = 0x4, fixed_abs, tag = 'smem constant byte address 0x4 - core index']
  #allocation1 [shape = 'u32[144,128]{1,0:T(1,128)}', space=vmem, size = 0x12000, scoped, tag = 'internal scratch']
  #allocation2 [shape = 's32[1]{0}', space=sflag, size = 0x4, scoped, tag = 'scoped memory for attn_vgg_before.3']
  #allocation3 [shape = 'u8[512]{0}', space=smem, size = 0x200, scoped, tag = 'prefetched SMEM operand 0']
  %s0 = inlined_call_operand.vmem [shape: f32[2], index: 0, kind: input, shape index: {}]
  %s1 = inlined_call_operand.vmem [shape: bf16[2,16,1024], index: 1, kind: input, shape index: {}]
  %s2 = inlined_call_operand.vmem [shape: bf16[40,16], index: 2, kind: input, shape index: {}]
  %s3 = inlined_call_operand.vmem [shape: f32[2,1,1024], index: 3, kind: output, shape index: {0}]
  %s4 = inlined_call_operand.vmem [shape: f32[2,1,32], index: 4, kind: output, shape index: {1}]
  %5 = xla_tuple %s3, %s4
  %s6 = sld [smem:[#allocation0]]
  $region49: #{attn_vgg_before.3} parent=0
    _
  %s8 = ssub.s32 1, %s6
  %s9 = scalar_select 0, %s8, %s6
  %s10 = sshll.u32 %s0, 4
  %s11 = int_to_ptr.vmem [resolvable:$true] %s10
  %13 = dma.vmem_to_smem %s11, 16, [#allocation3], [#allocation2]
  %14 = dma.done [#allocation2], 16
  %15 = sfence
  loop: start=0, step=1, limit=4
  $region2: #{attn_vgg_before.3} parent=0 // loop_pre_header
    _
  $region3: #{attn_vgg_before.3} parent=0 // loop_header
    %s17 = sphi 0, %s21
    %p18 = scmp.ge.s32.totalorder %s17, 4
    %s27 = sphi 0, %s29
    %s30 = sphi 0, %s27
    %s31 = sphi 0, %s30
    %s47 = sphi 0, %s31
    %s51 = sphi 0, %s51
    %s53 = sphi 0, %s51
    %s54 = sphi 0, %s53
    %s68 = sphi 0, %s54
    %s74 = sphi 0, %s76
    %s77 = sphi 0, %s74
    %s78 = sphi 0, %s77
    %s94 = sphi 0, %s78
    %s100 = sphi 0, %s102
    %s103 = sphi 0, %s100
    %s104 = sphi 0, %s103
    %s120 = sphi 0, %s104
  $region4: #{attn_vgg_before.3} parent=0 // loop_header_branch
    %20 = sbr.rel (%p18) target = $region8
  $region5: #{attn_vgg_before.3} parent=0 // loop_body
    %s22 = ssub.s32 %s17, 1
    %s23 = ssub.s32 %s17, 2
    %s24 = sadd.s32 %s17, 1
    %s25 = ssub.s32 %s17, %s24
    %p26 = scmp.eq.s32.totalorder %s25, 0
    %s28 = sadd.s32 %s27, 1
    %s29 = scalar_select %p26, %s27, %s28
    %p32 = pneg %p26
    %p33 = scmp.eq.s32.totalorder %s17, 1
    %p34 = por %p32, %p33
    %p35 = scmp.ne.s32.totalorder %s27, %s30
    %p36 = scmp.eq.s32.totalorder %s17, 0
    %p37 = por %p35, %p36
    %p38 = scmp.ne.s32.totalorder %s27, %s30
    %p39 = scmp.eq.s32.totalorder %s22, 1
    %p40 = por %p38, %p39
    %p41 = scmp.ne.s32.totalorder %s30, %s31
    %p42 = scmp.eq.s32.totalorder %s22, 0
    %p43 = por %p41, %p42
    %p44 = scmp.ne.s32.totalorder %s30, %s31
    %p45 = scmp.eq.s32.totalorder %s23, 1
    %p46 = por %p44, %p45
    %p48 = scmp.ne.s32.totalorder %s31, %s47
    %p49 = scmp.eq.s32.totalorder %s23, 0
    %p50 = por %p48, %p49
    %s52 = sadd.s32 %s51, 1
    %p55 = scmp.eq.s32.totalorder %s17, 1
    %p56 = scmp.ne.s32.totalorder %s51, %s53
    %p57 = scmp.eq.s32.totalorder %s17, 0
    %p58 = por %p56, %p57
    %p59 = scmp.ne.s32.totalorder %s51, %s53
    %p60 = scmp.eq.s32.totalorder %s22, 1
    %p61 = por %p59, %p60
    %p62 = scmp.ne.s32.totalorder %s53, %s54
    %p63 = scmp.eq.s32.totalorder %s22, 0
    %p64 = por %p62, %p63
    %p65 = scmp.ne.s32.totalorder %s53, %s54
    %p66 = scmp.eq.s32.totalorder %s23, 1
    %p67 = por %p65, %p66
    %p69 = scmp.ne.s32.totalorder %s54, %s68
    %p70 = scmp.eq.s32.totalorder %s23, 0
    %p71 = por %p69, %p70
    %s72 = ssub.s32 %s17, %s24
    %p73 = scmp.eq.s32.totalorder %s72, 0
    %s75 = sadd.s32 %s74, 1
    %s76 = scalar_select %p73, %s74, %s75
    %p79 = pneg %p73
    %p80 = scmp.eq.s32.totalorder %s17, 1
    %p81 = por %p79, %p80
    %p82 = scmp.ne.s32.totalorder %s74, %s77
    %p83 = scmp.eq.s32.totalorder %s17, 0
    %p84 = por %p82, %p83
    %p85 = scmp.ne.s32.totalorder %s74, %s77
    %p86 = scmp.eq.s32.totalorder %s22, 1
    %p87 = por %p85, %p86
    %p88 = scmp.ne.s32.totalorder %s77, %s78
    %p89 = scmp.eq.s32.totalorder %s22, 0
    %p90 = por %p88, %p89
    %p91 = scmp.ne.s32.totalorder %s77, %s78
    %p92 = scmp.eq.s32.totalorder %s23, 1
    %p93 = por %p91, %p92
    %p95 = scmp.ne.s32.totalorder %s78, %s94
    %p96 = scmp.eq.s32.totalorder %s23, 0
    %p97 = por %p95, %p96
    %s98 = ssub.s32 %s17, %s24
    %p99 = scmp.eq.s32.totalorder %s98, 0
    %s101 = sadd.s32 %s100, 1
    %s102 = scalar_select %p99, %s100, %s101
    %p105 = pneg %p99
    %p106 = scmp.eq.s32.totalorder %s17, 1
    %p107 = por %p105, %p106
    %p108 = scmp.ne.s32.totalorder %s100, %s103
    %p109 = scmp.eq.s32.totalorder %s17, 0
    %p110 = por %p108, %p109
    %p111 = scmp.ne.s32.totalorder %s100, %s103
    %p112 = scmp.eq.s32.totalorder %s22, 1
    %p113 = por %p111, %p112
    %p114 = scmp.ne.s32.totalorder %s103, %s104
    %p115 = scmp.eq.s32.totalorder %s22, 0
    %p116 = por %p114, %p115
    %p117 = scmp.ne.s32.totalorder %s103, %s104
    %p118 = scmp.eq.s32.totalorder %s23, 1
    %p119 = por %p117, %p118
    %p121 = scmp.ne.s32.totalorder %s104, %s120
    %p122 = scmp.eq.s32.totalorder %s23, 0
    %p123 = por %p121, %p122
    %p124 = scmp.le.s32.totalorder 1, %s17
    %p125 = scmp.lt.s32.totalorder %s17, 3
    %p126 = pnand %p124, %p125
    %p127 = pneg %p126
    // Predicated region
    $region9: #{attn_vgg_before.3} parent=5 // pred_check
      _
    $region10: #{attn_vgg_before.3} parent=5 // pred_check_branch
      %129 = sbr.rel (%p126) target = $region12
    $region11: #{attn_vgg_before.3} parent=5 // pred_region
      %s130 = ssub.s32 %s17, 1
      // Predicated region
      $region13: #{attn_vgg_before.3} parent=11 // pred_check
        %p131 = pneg %p64
      $region14: #{attn_vgg_before.3} parent=11 // pred_check_branch
        %133 = sbr.rel (%p131) target = $region16
      $region15: #{attn_vgg_before.3} parent=11 // pred_region
        _
      $region16: #{attn_vgg_before.3} parent=11 // pred_fallthru
        _
    $region12: #{attn_vgg_before.3} parent=5 // pred_fallthru
      _
    %p134 = scmp.lt.s32.totalorder %s17, 2
    // Predicated region
    $region17: #{attn_vgg_before.3} parent=5 // pred_check
      %p135 = pneg %p134
    $region18: #{attn_vgg_before.3} parent=5 // pred_check_branch
      %137 = sbr.rel (%p135) target = $region20
    $region19: #{attn_vgg_before.3} parent=5 // pred_region
      // Predicated region
      $region21: #{attn_vgg_before.3} parent=19 // pred_check
        %p138 = pneg %p37
      $region22: #{attn_vgg_before.3} parent=19 // pred_check_branch
        %140 = sbr.rel (%p138) target = $region24
      $region23: #{attn_vgg_before.3} parent=19 // pred_region
        %p141 = scmp.lt.s32.totalorder %s17, 1
        %s142 = scalar_select %p141, %s17, 1
        %s143 = smul.addr %s142, 16
        %s144 = smul.addr %s143, 4
        %s145 = scalar_lea.vmem %s1, %s144
      $region24: #{attn_vgg_before.3} parent=19 // pred_fallthru
        _
    $region20: #{attn_vgg_before.3} parent=5 // pred_fallthru
      _
    %p146 = scmp.le.s32.totalorder 1, %s17
    %p147 = scmp.lt.s32.totalorder %s17, 3
    %p148 = pnand %p146, %p147
    %p149 = pneg %p148
    // Predicated region
    $region25: #{attn_vgg_before.3} parent=5 // pred_check
      _
    $region26: #{attn_vgg_before.3} parent=5 // pred_check_branch
      %151 = sbr.rel (%p148) target = $region28
    $region27: #{attn_vgg_before.3} parent=5 // pred_region
      %s152 = ssub.s32 %s17, 1
      %p153 = scmp.lt.s32.totalorder %s22, 1
      %s154 = scalar_select %p153, %s22, 1
      %s155 = smul.addr %s154, 16
      %s156 = smul.addr %s155, 4
      %s157 = scalar_lea.vmem %s1, %s156
      %p158 = pneg %p43
      %p159 = pneg %p40
      %p160 = pneg %p64
      %p161 = pneg %p61
      %p162 = pneg %p90
      %p163 = pneg %p87
      %p164 = scmp.lt.s32.totalorder %s22, 1
      %s165 = scalar_select %p164, %s22, 1
      %s166 = smul.addr %s165, 8
      %s167 = scalar_lea.vmem %s3, %s166
      %p168 = pneg %p116
      %p169 = pneg %p113
      %p170 = scmp.lt.s32.totalorder %s22, 1
      %s171 = scalar_select %p170, %s22, 1
      %s172 = scalar_lea.vmem %s4, %s171
      %p173 = scmp.lt.s32.totalorder %s22, 1
      %s174 = scalar_select %p173, %s22, 1
      %s175 = smul.addr %s174, 16
      %s176 = smul.addr %s175, 4
      %s177 = scalar_lea.vmem %s1, %s176
      %p178 = scmp.lt.s32.totalorder %s22, 1
      %s179 = scalar_select %p178, %s22, 1
      %s180 = smul.addr %s179, 8
      %s181 = scalar_lea.vmem %s3, %s180
      %p182 = scmp.lt.s32.totalorder %s22, 1
      %s183 = scalar_select %p182, %s22, 1
      %s184 = scalar_lea.vmem %s4, %s183
      %v186 = vld [vmem:[%s2] sm:$0xf]
      %v187 = vld [vmem:[%s2 + $0x4] sm:$0xf]
      %v188 = vld [vmem:[%s2 + $0x8] sm:$0xf]
      %v189 = vld [vmem:[%s2 + $0xc] sm:$0xf]
      %v190 = vld [vmem:[%s2 + $0x10] sm:$0xf]
      %v191 = vld [vmem:[%s177] sm:$0xff]
      %v192 = vld [vmem:[%s177 + $0x8] sm:$0xff]
      %v193 = vld [vmem:[%s177 + $0x10] sm:$0xff]
      %v194 = vld [vmem:[%s177 + $0x18] sm:$0xff]
      %v195 = vld [vmem:[%s177 + $0x20] sm:$0xff]
      %v196 = vld [vmem:[%s177 + $0x28] sm:$0xff]
      %v197 = vld [vmem:[%s177 + $0x30] sm:$0xff]
      %v198 = vld [vmem:[%s177 + $0x38] sm:$0xff]
      %v204 = vunpack.c.l.b16 %v186
      %v205 = vunpack.c.l.b16 %v187
      %v206 = vunpack.c.l.b16 %v188
      %v207 = vunpack.c.l.b16 %v189
      %v208 = vunpack.c.l.b16 %v190
      %v209 = vpack.c.b16 %v205, %v204
      %v210 = vpack.c.b16 %v207, %v206
      %v211 = vpack.c.b16 %v208, %v208
      %v220 = vunpack.c.l.b16 %v191
      %v221 = vunpack.c.h.b16 %v191
      %v222 = vunpack.c.l.b16 %v192
      %v223 = vunpack.c.h.b16 %v192
      %v224 = vunpack.c.l.b16 %v193
      %v225 = vunpack.c.h.b16 %v193
      %v226 = vunpack.c.l.b16 %v194
      %v227 = vunpack.c.h.b16 %v194
      %v228 = vunpack.c.l.b16 %v195
      %v229 = vunpack.c.h.b16 %v195
      %v230 = vunpack.c.l.b16 %v196
      %v231 = vunpack.c.h.b16 %v196
      %v232 = vunpack.c.l.b16 %v197
      %v233 = vunpack.c.h.b16 %v197
      %v234 = vunpack.c.l.b16 %v198
      %v235 = vunpack.c.h.b16 %v198
      %v236 = vpack.c.b16 %v228, %v220
      %v237 = vpack.c.b16 %v229, %v221
      %v238 = vpack.c.b16 %v230, %v222
      %v239 = vpack.c.b16 %v231, %v223
      %v240 = vpack.c.b16 %v232, %v224
      %v241 = vpack.c.b16 %v233, %v225
      %v242 = vpack.c.b16 %v234, %v226
      %v243 = vpack.c.b16 %v235, %v227
      %vm252 = vcmask 130048
      %v254 = vsel %vm252, %v209, 0
      %v257 = vsel %vm252, %v210, 0
      %v260 = vsel %vm252, %v211, 0
      %262 = vmatprep.subr.bf16.mxu0 %v237
      %263 = vmatpush1.bf16.msra.mxu0 %v236
      %264 = vmatprep.subr.bf16.mxu0 0
      %265 = vmatpush1.bf16.msra.mxu0 0
      %266 = vmatprep.subr.bf16.mxu0 0
      %267 = vmatpush1.bf16.msra.mxu0 0
      %268 = vmatprep.subr.bf16.mxu0 0
      %269 = vmatpush1.bf16.msra.mxu0 0
      %270 = vmatprep.subr.bf16.mxu0 0
      %271 = vmatpush1.bf16.msra.mxu0 0
      %272 = vmatprep.subr.bf16.mxu0 0
      %273 = vmatpush1.bf16.msra.mxu0 0
      %274 = vmatprep.subr.bf16.mxu0 0
      %275 = vmatpush1.bf16.msra.mxu0 0
      %276 = vmatprep.subr.bf16.mxu0 0
      %277 = vmatpush1.bf16.msra.mxu0 0
      %278 = vmatprep.subr.bf16.mxu0 0
      %279 = vmatpush1.bf16.msra.mxu0 0
      %280 = vmatprep.subr.bf16.mxu0 0
      %281 = vmatpush1.bf16.msra.mxu0 0
      %282 = vmatprep.subr.bf16.mxu0 0
      %283 = vmatpush1.bf16.msra.mxu0 0
      %284 = vmatprep.subr.bf16.mxu0 0
      %285 = vmatpush1.bf16.msra.mxu0 0
      %286 = vmatprep.subr.bf16.mxu0 0
      %287 = vmatpush1.bf16.msra.mxu0 0
      %288 = vmatprep.subr.bf16.mxu0 0
      %289 = vmatpush1.bf16.msra.mxu0 0
      %290 = vmatprep.subr.bf16.mxu0 0
      %291 = vmatpush1.bf16.msra.mxu0 0
      %292 = vmatprep.subr.bf16.mxu0 0
      %293 = vmatpush1.bf16.msra.mxu0 0
      %294 = vmatprep.mubr.bf16.mxu0 0
      %295 = vmatmul.mubr.bf16.gmra.mrb[0].mxu0 %v254
      %v296 = vpop.f32.mrb[0].mxu0
      %v297 = vadd.f32 0.0, %v296
      %v298 = vpop.f32.mrb[0].mxu0
      %v299 = vadd.f32 0.0, %v298
      %v300 = vpop.f32.mrb[0].mxu0
      %v301 = vadd.f32 0.0, %v300
      %v302 = vpop.f32.mrb[0].mxu0
      %v303 = vadd.f32 0.0, %v302
      %304 = vmatprep.mubr.bf16.mxu0 0
      %305 = vmatmul.mubr.bf16.gmra.mrb[0].mxu0 %v257
      %v306 = vpop.f32.mrb[0].mxu0
      %v307 = vadd.f32 0.0, %v306
      %v308 = vpop.f32.mrb[0].mxu0
      %v309 = vadd.f32 0.0, %v308
      %v310 = vpop.f32.mrb[0].mxu0
      %v311 = vadd.f32 0.0, %v310
      %v312 = vpop.f32.mrb[0].mxu0
      %v313 = vadd.f32 0.0, %v312
      %314 = vmatprep.mubr.bf16.mxu0 0
      %315 = vmatmul.mubr.bf16.gmra.mrb[0].mxu0 %v260
      %v316 = vpop.f32.mrb[0].mxu0
      %v317 = vadd.f32 0.0, %v316
      %v318 = vpop.f32.mrb[0].mxu0
      %v319 = vadd.f32 0.0, %v318
      %v320 = vpop.f32.mrb[0].mxu0
      %v321 = vpop.f32.mrb[0].mxu0
      %322 = vdwg.mxu0
      %323 = vmatprep.subr.bf16.mxu0 %v239
      %324 = vmatpush1.bf16.msra.mxu0 %v238
      %325 = vmatprep.subr.bf16.mxu0 0
      %326 = vmatpush1.bf16.msra.mxu0 0
      %327 = vmatprep.subr.bf16.mxu0 0
      %328 = vmatpush1.bf16.msra.mxu0 0
      %329 = vmatprep.subr.bf16.mxu0 0
      %330 = vmatpush1.bf16.msra.mxu0 0
      %331 = vmatprep.subr.bf16.mxu0 0
      %332 = vmatpush1.bf16.msra.mxu0 0
      %333 = vmatprep.subr.bf16.mxu0 0
      %334 = vmatpush1.bf16.msra.mxu0 0
      %335 = vmatprep.subr.bf16.mxu0 0
      %336 = vmatpush1.bf16.msra.mxu0 0
      %337 = vmatprep.subr.bf16.mxu0 0
      %338 = vmatpush1.bf16.msra.mxu0 0
      %339 = vmatprep.subr.bf16.mxu0 0
      %340 = vmatpush1.bf16.msra.mxu0 0
      %341 = vmatprep.subr.bf16.mxu0 0
      %342 = vmatpush1.bf16.msra.mxu0 0
      %343 = vmatprep.subr.bf16.mxu0 0
      %344 = vmatpush1.bf16.msra.mxu0 0
      %345 = vmatprep.subr.bf16.mxu0 0
      %346 = vmatpush1.bf16.msra.mxu0 0
      %347 = vmatprep.subr.bf16.mxu0 0
      %348 = vmatpush1.bf16.msra.mxu0 0
      %349 = vmatprep.subr.bf16.mxu0 0
      %350 = vmatpush1.bf16.msra.mxu0 0
      %351 = vmatprep.subr.bf16.mxu0 0
      %352 = vmatpush1.bf16.msra.mxu0 0
      %353 = vmatprep.subr.bf16.mxu0 0
      %354 = vmatpush1.bf16.msra.mxu0 0
      %355 = vmatprep.mubr.bf16.mxu0 0
      %356 = vmatmul.mubr.bf16.gmra.mrb[0].mxu0 %v254
      %v357 = vpop.f32.mrb[0].mxu0
      %v358 = vadd.f32 0.0, %v357
      %v359 = vpop.f32.mrb[0].mxu0
      %v360 = vadd.f32 0.0, %v359
      %v361 = vpop.f32.mrb[0].mxu0
      %v362 = vadd.f32 0.0, %v361
      %v363 = vpop.f32.mrb[0].mxu0
      %v364 = vadd.f32 0.0, %v363
      %365 = vmatprep.mubr.bf16.mxu0 0
      %366 = vmatmul.mubr.bf16.gmra.mrb[0].mxu0 %v257
      %v367 = vpop.f32.mrb[0].mxu0
      %v368 = vadd.f32 0.0, %v367
      %v369 = vpop.f32.mrb[0].mxu0
      %v370 = vadd.f32 0.0, %v369
      %v371 = vpop.f32.mrb[0].mxu0
      %v372 = vadd.f32 0.0, %v371
      %v373 = vpop.f32.mrb[0].mxu0
      %v374 = vadd.f32 0.0, %v373
      %375 = vmatprep.mubr.bf16.mxu0 0
      %376 = vmatmul.mubr.bf16.gmra.mrb[0].mxu0 %v260
      %v377 = vpop.f32.mrb[0].mxu0
      %v378 = vadd.f32 0.0, %v377
      %v379 = vpop.f32.mrb[0].mxu0
      %v380 = vadd.f32 0.0, %v379
      %v381 = vpop.f32.mrb[0].mxu0
      %v382 = vpop.f32.mrb[0].mxu0
      %383 = vdwg.mxu0
      %384 = vmatprep.subr.bf16.mxu0 %v241
      %385 = vmatpush1.bf16.msra.mxu0 %v240
      %386 = vmatprep.subr.bf16.mxu0 0
      %387 = vmatpush1.bf16.msra.mxu0 0
      %388 = vmatprep.subr.bf16.mxu0 0
      %389 = vmatpush1.bf16.msra.mxu0 0
      %390 = vmatprep.subr.bf16.mxu0 0
      %391 = vmatpush1.bf16.msra.mxu0 0
      %392 = vmatprep.subr.bf16.mxu0 0
      %393 = vmatpush1.bf16.msra.mxu0 0
      %394 = vmatprep.subr.bf16.mxu0 0
      %395 = vmatpush1.bf16.msra.mxu0 0
      %396 = vmatprep.subr.bf16.mxu0 0
      %397 = vmatpush1.bf16.msra.mxu0 0
      %398 = vmatprep.subr.bf16.mxu0 0
      %399 = vmatpush1.bf16.msra.mxu0 0
      %400 = vmatprep.subr.bf16.mxu0 0
      %401 = vmatpush1.bf16.msra.mxu0 0
      %402 = vmatprep.subr.bf16.mxu0 0
      %403 = vmatpush1.bf16.msra.mxu0 0
      %404 = vmatprep.subr.bf16.mxu0 0
      %405 = vmatpush1.bf16.msra.mxu0 0
      %406 = vmatprep.subr.bf16.mxu0 0
      %407 = vmatpush1.bf16.msra.mxu0 0
      %408 = vmatprep.subr.bf16.mxu0 0
      %409 = vmatpush1.bf16.msra.mxu0 0
      %410 = vmatprep.subr.bf16.mxu0 0
      %411 = vmatpush1.bf16.msra.mxu0 0
      %412 = vmatprep.subr.bf16.mxu0 0
      %413 = vmatpush1.bf16.msra.mxu0 0
      %414 = vmatprep.subr.bf16.mxu0 0
      %415 = vmatpush1.bf16.msra.mxu0 0
      %416 = vmatprep.mubr.bf16.mxu0 0
      %417 = vmatmul.mubr.bf16.gmra.mrb[0].mxu0 %v254
      %v418 = vpop.f32.mrb[0].mxu0
      %v419 = vadd.f32 0.0, %v418
      %v420 = vpop.f32.mrb[0].mxu0
      %v421 = vadd.f32 0.0, %v420
      %v422 = vpop.f32.mrb[0].mxu0
      %v423 = vadd.f32 0.0, %v422
      %v424 = vpop.f32.mrb[0].mxu0
      %v425 = vadd.f32 0.0, %v424
      %426 = vmatprep.mubr.bf16.mxu0 0
      %427 = vmatmul.mubr.bf16.gmra.mrb[0].mxu0 %v257
      %v428 = vpop.f32.mrb[0].mxu0
      %v429 = vadd.f32 0.0, %v428
      %v430 = vpop.f32.mrb[0].mxu0
      %v431 = vadd.f32 0.0, %v430
      %v432 = vpop.f32.mrb[0].mxu0
      %v433 = vadd.f32 0.0, %v432
      %v434 = vpop.f32.mrb[0].mxu0
      %v435 = vadd.f32 0.0, %v434
      %436 = vmatprep.mubr.bf16.mxu0 0
      %437 = vmatmul.mubr.bf16.gmra.mrb[0].mxu0 %v260
      %v438 = vpop.f32.mrb[0].mxu0
      %v439 = vadd.f32 0.0, %v438
      %v440 = vpop.f32.mrb[0].mxu0
      %v441 = vadd.f32 0.0, %v440
      %v442 = vpop.f32.mrb[0].mxu0
      %v443 = vpop.f32.mrb[0].mxu0
      %444 = vdwg.mxu0
      %445 = vmatprep.subr.bf16.mxu0 %v243
      %446 = vmatpush1.bf16.msra.mxu0 %v242
      %447 = vmatprep.subr.bf16.mxu0 0
      %448 = vmatpush1.bf16.msra.mxu0 0
      %449 = vmatprep.subr.bf16.mxu0 0
      %450 = vmatpush1.bf16.msra.mxu0 0
      %451 = vmatprep.subr.bf16.mxu0 0
      %452 = vmatpush1.bf16.msra.mxu0 0
      %453 = vmatprep.subr.bf16.mxu0 0
      %454 = vmatpush1.bf16.msra.mxu0 0
      %455 = vmatprep.subr.bf16.mxu0 0
      %456 = vmatpush1.bf16.msra.mxu0 0
      %457 = vmatprep.subr.bf16.mxu0 0
      %458 = vmatpush1.bf16.msra.mxu0 0
      %459 = vmatprep.subr.bf16.mxu0 0
      %460 = vmatpush1.bf16.msra.mxu0 0
      %461 = vmatprep.subr.bf16.mxu0 0
      %462 = vmatpush1.bf16.msra.mxu0 0
      %463 = vmatprep.subr.bf16.mxu0 0
      %464 = vmatpush1.bf16.msra.mxu0 0
      %465 = vmatprep.subr.bf16.mxu0 0
      %466 = vmatpush1.bf16.msra.mxu0 0
      %467 = vmatprep.subr.bf16.mxu0 0
      %468 = vmatpush1.bf16.msra.mxu0 0
      %469 = vmatprep.subr.bf16.mxu0 0
      %470 = vmatpush1.bf16.msra.mxu0 0
      %471 = vmatprep.subr.bf16.mxu0 0
      %472 = vmatpush1.bf16.msra.mxu0 0
      %473 = vmatprep.subr.bf16.mxu0 0
      %474 = vmatpush1.bf16.msra.mxu0 0
      %475 = vmatprep.subr.bf16.mxu0 0
      %476 = vmatpush1.bf16.msra.mxu0 0
      %477 = vmatprep.mubr.bf16.mxu0 0
      %478 = vmatmul.mubr.bf16.gmra.mrb[0].mxu0 %v254
      %v479 = vpop.f32.mrb[0].mxu0
      %v480 = vadd.f32 0.0, %v479
      %v481 = vpop.f32.mrb[0].mxu0
      %v482 = vadd.f32 0.0, %v481
      %v483 = vpop.f32.mrb[0].mxu0
      %v484 = vadd.f32 0.0, %v483
      %v485 = vpop.f32.mrb[0].mxu0
      %v486 = vadd.f32 0.0, %v485
      %487 = vmatprep.mubr.bf16.mxu0 0
      %488 = vmatmul.mubr.bf16.gmra.mrb[0].mxu0 %v257
      %v489 = vpop.f32.mrb[0].mxu0
      %v490 = vadd.f32 0.0, %v489
      %v491 = vpop.f32.mrb[0].mxu0
      %v492 = vadd.f32 0.0, %v491
      %v493 = vpop.f32.mrb[0].mxu0
      %v494 = vadd.f32 0.0, %v493
      %v495 = vpop.f32.mrb[0].mxu0
      %v496 = vadd.f32 0.0, %v495
      %497 = vmatprep.mubr.bf16.mxu0 0
      %498 = vmatmul.mubr.bf16.gmra.mrb[0].mxu0 %v260
      %v499 = vpop.f32.mrb[0].mxu0
      %v500 = vadd.f32 0.0, %v499
      %v501 = vpop.f32.mrb[0].mxu0
      %v502 = vadd.f32 0.0, %v501
      %v503 = vpop.f32.mrb[0].mxu0
      %v504 = vpop.f32.mrb[0].mxu0
      %505 = vdwg.mxu0
      %s506 = sld [smem:[#allocation3 + %s22]]
      %v507 = vstv %s506
      %v508 = vadd.f32 %v317, %v507
      %v509 = vadd.f32 %v319, %v507
      %v510 = vadd.f32 %v378, %v507
      %v511 = vadd.f32 %v380, %v507
      %v512 = vadd.f32 %v439, %v507
      %v513 = vadd.f32 %v441, %v507
      %v514 = vadd.f32 %v500, %v507
      %v515 = vadd.f32 %v502, %v507
      %vm516 = vcmask 1040384
      %v517 = vsel %vm516, %v508, -inf
      %v518 = vsel %vm516, %v509, -inf
      %v519 = vsel %vm516, %v510, -inf
      %v520 = vsel %vm516, %v511, -inf
      %v521 = vsel %vm516, %v512, -inf
      %v522 = vmax.f32 %v517, %v521
      %v523 = vsel %vm516, %v513, -inf
      %v524 = vmax.f32 %v518, %v523
      %v525 = vsel %vm516, %v514, -inf
      %v526 = vmax.f32 %v519, %v525
      %v527 = vsel %vm516, %v515, -inf
      %v528 = vmax.f32 %v520, %v527
      %v529 = vmax.f32 %v522, %v524
      %v530 = vmax.f32 %v526, %v528
      %v531 = vmax.f32 %v529, %v530
      %532 = vmax.xlane.f32.xlu0 %v531
      %v533 = vpop.xlane.xlu0 %532
      %v534 = vsub.f32 %v508, %v533
      %v535 = vsub.f32 %v509, %v533
      %v536 = vsub.f32 %v510, %v533
      %v537 = vsub.f32 %v511, %v533
      %v538 = vsub.f32 %v512, %v533
      %v539 = vsub.f32 %v513, %v533
      %v540 = vsub.f32 %v514, %v533
      %v541 = vsub.f32 %v515, %v533
      %v542 = vmul.f32 %v534, 1.442695
      %v543 = vpow.pop %v542
      %v544 = vmul.f32 %v535, 1.442695
      %v545 = vpow.pop %v544
      %v546 = vmul.f32 %v536, 1.442695
      %v547 = vpow.pop %v546
      %v548 = vmul.f32 %v537, 1.442695
      %v549 = vpow.pop %v548
      %v550 = vmul.f32 %v538, 1.442695
      %v551 = vpow.pop %v550
      %v552 = vmul.f32 %v539, 1.442695
      %v553 = vpow.pop %v552
      %v554 = vmul.f32 %v540, 1.442695
      %v555 = vpow.pop %v554
      %v556 = vmul.f32 %v541, 1.442695
      %v557 = vpow.pop %v556
      %v558 = vsel %vm516, %v543, 0.0
      %v559 = vsel %vm516, %v545, 0.0
      %v560 = vadd.f32 %v558, %v559
      %v561 = vsel %vm516, %v547, 0.0
      %v562 = vadd.f32 %v560, %v561
      %v563 = vsel %vm516, %v549, 0.0
      %v564 = vadd.f32 %v562, %v563
      %v565 = vsel %vm516, %v551, 0.0
      %v566 = vadd.f32 %v564, %v565
      %v567 = vsel %vm516, %v553, 0.0
      %v568 = vadd.f32 %v566, %v567
      %v569 = vsel %vm516, %v555, 0.0
      %v570 = vadd.f32 %v568, %v569
      %v571 = vsel %vm516, %v557, 0.0
      %v572 = vadd.f32 %v570, %v571
      %573 = vadd.xlane.f32.xlu0 %v572
      %v574 = vpop.xlane.xlu0 %573
      %v575 = vrcp.pop %v574
      %v576 = vmul.f32 %v543, %v575
      %v577 = vmul.f32 %v545, %v575
      %v578 = vmul.f32 %v547, %v575
      %v579 = vmul.f32 %v549, %v575
      %v580 = vmul.f32 %v551, %v575
      %v581 = vmul.f32 %v553, %v575
      %v582 = vmul.f32 %v555, %v575
      %v583 = vmul.f32 %v557, %v575
      %584 = vmatprep.subr.mxu0 %v299
      %585 = vmatpush1.xpose.msra.mxu0 %v297
      %586 = vmatprep.subr.mxu0 %v303
      %587 = vmatpush1.xpose.msra.mxu0 %v301
      %588 = vmatprep.subr.mxu0 %v309
      %589 = vmatpush1.xpose.msra.mxu0 %v307
      %590 = vmatprep.subr.mxu0 %v313
      %591 = vmatpush1.xpose.msra.mxu0 %v311
      %592 = vmatprep.subr.mxu0 %v319
      %593 = vmatpush1.xpose.msra.mxu0 %v317
      %594 = vmatprep.subr.mxu0 0.0
      %595 = vmatpush1.xpose.msra.mxu0 0.0
      %596 = vmatprep.subr.mxu0 0.0
      %597 = vmatpush1.xpose.msra.mxu0 0.0
      %598 = vmatprep.subr.mxu0 0.0
      %599 = vmatpush1.xpose.msra.mxu0 0.0
      %600 = vmatprep.subr.mxu0 0.0
      %601 = vmatpush1.xpose.msra.mxu0 0.0
      %602 = vmatprep.subr.mxu0 0.0
      %603 = vmatpush1.xpose.msra.mxu0 0.0
      %604 = vmatprep.subr.mxu0 0.0
      %605 = vmatpush1.xpose.msra.mxu0 0.0
      %606 = vmatprep.subr.mxu0 0.0
      %607 = vmatpush1.xpose.msra.mxu0 0.0
      %608 = vmatprep.subr.mxu0 0.0
      %609 = vmatpush1.xpose.msra.mxu0 0.0
      %610 = vmatprep.subr.mxu0 0.0
      %611 = vmatpush1.xpose.msra.mxu0 0.0
      %612 = vmatprep.subr.mxu0 0.0
      %613 = vmatpush1.xpose.msra.mxu0 0.0
      %614 = vmatprep.subr.mxu0 0.0
      %615 = vmatpush1.xpose.msra.mxu0 0.0
      %616 = vmatprep.subr.mxu0 0.0
      %617 = vmatpush1.xpose.msra.mxu0 0.0
      %618 = vmatprep.subr.mxu0 0.0
      %619 = vmatpush1.xpose.msra.mxu0 0.0
      %620 = vmatprep.subr.mxu0 0.0
      %621 = vmatpush1.xpose.msra.mxu0 0.0
      %622 = vmatprep.subr.mxu0 0.0
      %623 = vmatpush1.xpose.msra.mxu0 0.0
      %624 = vmatprep.subr.mxu0 0.0
      %625 = vmatpush1.xpose.msra.mxu0 0.0
      %626 = vmatprep.subr.mxu0 0.0
      %627 = vmatpush1.xpose.msra.mxu0 0.0
      %628 = vmatprep.subr.mxu0 0.0
      %629 = vmatpush1.xpose.msra.mxu0 0.0
      %630 = vmatprep.subr.mxu0 0.0
      %631 = vmatpush1.xpose.msra.mxu0 0.0
      %632 = vmatprep.subr.mxu0 0.0
      %633 = vmatpush1.xpose.msra.mxu0 0.0
      %634 = vmatprep.subr.mxu0 0.0
      %635 = vmatpush1.xpose.msra.mxu0 0.0
      %636 = vmatprep.subr.mxu0 0.0
      %637 = vmatpush1.xpose.msra.mxu0 0.0
      %638 = vmatprep.subr.mxu0 0.0
      %639 = vmatpush1.xpose.msra.mxu0 0.0
      %640 = vmatprep.subr.mxu0 0.0
      %641 = vmatpush1.xpose.msra.mxu0 0.0
      %642 = vmatprep.subr.mxu0 0.0
      %643 = vmatpush1.xpose.msra.mxu0 0.0
      %644 = vmatprep.subr.mxu0 0.0
      %645 = vmatpush1.xpose.msra.mxu0 0.0
      %646 = vmatprep.subr.mxu0 0.0
      %647 = vmatpush1.xpose.msra.mxu0 0.0
      %648 = vmatprep.mubr.f32.mxu0 %v577
      %649 = vmatmul.mubr.f32.gmra.mrb[0].mxu0 %v576
      %v650 = vpop.f32.mrb[0].mxu0
      %v651 = vadd.f32 0.0, %v650
      %v652 = vpop.f32.mrb[0].mxu0
      %653 = vdwg.mxu0
      %654 = vmatprep.subr.mxu0 %v360
      %655 = vmatpush1.xpose.msra.mxu0 %v358
      %656 = vmatprep.subr.mxu0 %v364
      %657 = vmatpush1.xpose.msra.mxu0 %v362
      %658 = vmatprep.subr.mxu0 %v370
      %659 = vmatpush1.xpose.msra.mxu0 %v368
      %660 = vmatprep.subr.mxu0 %v374
      %661 = vmatpush1.xpose.msra.mxu0 %v372
      %662 = vmatprep.subr.mxu0 %v380
      %663 = vmatpush1.xpose.msra.mxu0 %v378
      %664 = vmatprep.subr.mxu0 0.0
      %665 = vmatpush1.xpose.msra.mxu0 0.0
      %666 = vmatprep.subr.mxu0 0.0
      %667 = vmatpush1.xpose.msra.mxu0 0.0
      %668 = vmatprep.subr.mxu0 0.0
      %669 = vmatpush1.xpose.msra.mxu0 0.0
      %670 = vmatprep.subr.mxu0 0.0
      %671 = vmatpush1.xpose.msra.mxu0 0.0
      %672 = vmatprep.subr.mxu0 0.0
      %673 = vmatpush1.xpose.msra.mxu0 0.0
      %674 = vmatprep.subr.mxu0 0.0
      %675 = vmatpush1.xpose.msra.mxu0 0.0
      %676 = vmatprep.subr.mxu0 0.0
      %677 = vmatpush1.xpose.msra.mxu0 0.0
      %678 = vmatprep.subr.mxu0 0.0
      %679 = vmatpush1.xpose.msra.mxu0 0.0
      %680 = vmatprep.subr.mxu0 0.0
      %681 = vmatpush1.xpose.msra.mxu0 0.0
      %682 = vmatprep.subr.mxu0 0.0
      %683 = vmatpush1.xpose.msra.mxu0 0.0
      %684 = vmatprep.subr.mxu0 0.0
      %685 = vmatpush1.xpose.msra.mxu0 0.0
      %686 = vmatprep.subr.mxu0 0.0
      %687 = vmatpush1.xpose.msra.mxu0 0.0
      %688 = vmatprep.subr.mxu0 0.0
      %689 = vmatpush1.xpose.msra.mxu0 0.0
      %690 = vmatprep.subr.mxu0 0.0
      %691 = vmatpush1.xpose.msra.mxu0 0.0
      %692 = vmatprep.subr.mxu0 0.0
      %693 = vmatpush1.xpose.msra.mxu0 0.0
      %694 = vmatprep.subr.mxu0 0.0
      %695 = vmatpush1.xpose.msra.mxu0 0.0
      %696 = vmatprep.subr.mxu0 0.0
      %697 = vmatpush1.xpose.msra.mxu0 0.0
      %698 = vmatprep.subr.mxu0 0.0
      %699 = vmatpush1.xpose.msra.mxu0 0.0
      %700 = vmatprep.subr.mxu0 0.0
      %701 = vmatpush1.xpose.msra.mxu0 0.0
      %702 = vmatprep.subr.mxu0 0.0
      %703 = vmatpush1.xpose.msra.mxu0 0.0
      %704 = vmatprep.subr.mxu0 0.0
      %705 = vmatpush1.xpose.msra.mxu0 0.0
      %706 = vmatprep.subr.mxu0 0.0
      %707 = vmatpush1.xpose.msra.mxu0 0.0
      %708 = vmatprep.subr.mxu0 0.0
      %709 = vmatpush1.xpose.msra.mxu0 0.0
      %710 = vmatprep.subr.mxu0 0.0
      %711 = vmatpush1.xpose.msra.mxu0 0.0
      %712 = vmatprep.subr.mxu0 0.0
      %713 = vmatpush1.xpose.msra.mxu0 0.0
      %714 = vmatprep.subr.mxu0 0.0
      %715 = vmatpush1.xpose.msra.mxu0 0.0
      %716 = vmatprep.subr.mxu0 0.0
      %717 = vmatpush1.xpose.msra.mxu0 0.0
      %718 = vmatprep.mubr.f32.mxu0 %v579
      %719 = vmatmul.mubr.f32.gmra.mrb[0].mxu0 %v578
      %v720 = vpop.f32.mrb[0].mxu0
      %v721 = vadd.f32 %v651, %v720
      %v722 = vpop.f32.mrb[0].mxu0
      %723 = vdwg.mxu0
      %724 = vmatprep.subr.mxu0 %v421
      %725 = vmatpush1.xpose.msra.mxu0 %v419
      %726 = vmatprep.subr.mxu0 %v425
      %727 = vmatpush1.xpose.msra.mxu0 %v423
      %728 = vmatprep.subr.mxu0 %v431
      %729 = vmatpush1.xpose.msra.mxu0 %v429
      %730 = vmatprep.subr.mxu0 %v435
      %731 = vmatpush1.xpose.msra.mxu0 %v433
      %732 = vmatprep.subr.mxu0 %v441
      %733 = vmatpush1.xpose.msra.mxu0 %v439
      %734 = vmatprep.subr.mxu0 0.0
      %735 = vmatpush1.xpose.msra.mxu0 0.0
      %736 = vmatprep.subr.mxu0 0.0
      %737 = vmatpush1.xpose.msra.mxu0 0.0
      %738 = vmatprep.subr.mxu0 0.0
      %739 = vmatpush1.xpose.msra.mxu0 0.0
      %740 = vmatprep.subr.mxu0 0.0
      %741 = vmatpush1.xpose.msra.mxu0 0.0
      %742 = vmatprep.subr.mxu0 0.0
      %743 = vmatpush1.xpose.msra.mxu0 0.0
      %744 = vmatprep.subr.mxu0 0.0
      %745 = vmatpush1.xpose.msra.mxu0 0.0
      %746 = vmatprep.subr.mxu0 0.0
      %747 = vmatpush1.xpose.msra.mxu0 0.0
      %748 = vmatprep.subr.mxu0 0.0
      %749 = vmatpush1.xpose.msra.mxu0 0.0
      %750 = vmatprep.subr.mxu0 0.0
      %751 = vmatpush1.xpose.msra.mxu0 0.0
      %752 = vmatprep.subr.mxu0 0.0
      %753 = vmatpush1.xpose.msra.mxu0 0.0
      %754 = vmatprep.subr.mxu0 0.0
      %755 = vmatpush1.xpose.msra.mxu0 0.0
      %756 = vmatprep.subr.mxu0 0.0
      %757 = vmatpush1.xpose.msra.mxu0 0.0
      %758 = vmatprep.subr.mxu0 0.0
      %759 = vmatpush1.xpose.msra.mxu0 0.0
      %760 = vmatprep.subr.mxu0 0.0
      %761 = vmatpush1.xpose.msra.mxu0 0.0
      %762 = vmatprep.subr.mxu0 0.0
      %763 = vmatpush1.xpose.msra.mxu0 0.0
      %764 = vmatprep.subr.mxu0 0.0
      %765 = vmatpush1.xpose.msra.mxu0 0.0
      %766 = vmatprep.subr.mxu0 0.0
      %767 = vmatpush1.xpose.msra.mxu0 0.0
      %768 = vmatprep.subr.mxu0 0.0
      %769 = vmatpush1.xpose.msra.mxu0 0.0
      %770 = vmatprep.subr.mxu0 0.0
      %771 = vmatpush1.xpose.msra.mxu0 0.0
      %772 = vmatprep.subr.mxu0 0.0
      %773 = vmatpush1.xpose.msra.mxu0 0.0
      %774 = vmatprep.subr.mxu0 0.0
      %775 = vmatpush1.xpose.msra.mxu0 0.0
      %776 = vmatprep.subr.mxu0 0.0
      %777 = vmatpush1.xpose.msra.mxu0 0.0
      %778 = vmatprep.subr.mxu0 0.0
      %779 = vmatpush1.xpose.msra.mxu0 0.0
      %780 = vmatprep.subr.mxu0 0.0
      %781 = vmatpush1.xpose.msra.mxu0 0.0
      %782 = vmatprep.subr.mxu0 0.0
      %783 = vmatpush1.xpose.msra.mxu0 0.0
      %784 = vmatprep.subr.mxu0 0.0
      %785 = vmatpush1.xpose.msra.mxu0 0.0
      %786 = vmatprep.subr.mxu0 0.0
      %787 = vmatpush1.xpose.msra.mxu0 0.0
      %788 = vmatprep.mubr.f32.mxu0 %v581
      %789 = vmatmul.mubr.f32.gmra.mrb[0].mxu0 %v580
      %v790 = vpop.f32.mrb[0].mxu0
      %v791 = vadd.f32 %v721, %v790
      %v792 = vpop.f32.mrb[0].mxu0
      %793 = vdwg.mxu0
      %794 = vmatprep.subr.mxu0 %v482
      %795 = vmatpush1.xpose.msra.mxu0 %v480
      %796 = vmatprep.subr.mxu0 %v486
      %797 = vmatpush1.xpose.msra.mxu0 %v484
      %798 = vmatprep.subr.mxu0 %v492
      %799 = vmatpush1.xpose.msra.mxu0 %v490
      %800 = vmatprep.subr.mxu0 %v496
      %801 = vmatpush1.xpose.msra.mxu0 %v494
      %802 = vmatprep.subr.mxu0 %v502
      %803 = vmatpush1.xpose.msra.mxu0 %v500
      %804 = vmatprep.subr.mxu0 0.0
      %805 = vmatpush1.xpose.msra.mxu0 0.0
      %806 = vmatprep.subr.mxu0 0.0
      %807 = vmatpush1.xpose.msra.mxu0 0.0
      %808 = vmatprep.subr.mxu0 0.0
      %809 = vmatpush1.xpose.msra.mxu0 0.0
      %810 = vmatprep.subr.mxu0 0.0
      %811 = vmatpush1.xpose.msra.mxu0 0.0
      %812 = vmatprep.subr.mxu0 0.0
      %813 = vmatpush1.xpose.msra.mxu0 0.0
      %814 = vmatprep.subr.mxu0 0.0
      %815 = vmatpush1.xpose.msra.mxu0 0.0
      %816 = vmatprep.subr.mxu0 0.0
      %817 = vmatpush1.xpose.msra.mxu0 0.0
      %818 = vmatprep.subr.mxu0 0.0
      %819 = vmatpush1.xpose.msra.mxu0 0.0
      %820 = vmatprep.subr.mxu0 0.0
      %821 = vmatpush1.xpose.msra.mxu0 0.0
      %822 = vmatprep.subr.mxu0 0.0
      %823 = vmatpush1.xpose.msra.mxu0 0.0
      %824 = vmatprep.subr.mxu0 0.0
      %825 = vmatpush1.xpose.msra.mxu0 0.0
      %826 = vmatprep.subr.mxu0 0.0
      %827 = vmatpush1.xpose.msra.mxu0 0.0
      %828 = vmatprep.subr.mxu0 0.0
      %829 = vmatpush1.xpose.msra.mxu0 0.0
      %830 = vmatprep.subr.mxu0 0.0
      %831 = vmatpush1.xpose.msra.mxu0 0.0
      %832 = vmatprep.subr.mxu0 0.0
      %833 = vmatpush1.xpose.msra.mxu0 0.0
      %834 = vmatprep.subr.mxu0 0.0
      %835 = vmatpush1.xpose.msra.mxu0 0.0
      %836 = vmatprep.subr.mxu0 0.0
      %837 = vmatpush1.xpose.msra.mxu0 0.0
      %838 = vmatprep.subr.mxu0 0.0
      %839 = vmatpush1.xpose.msra.mxu0 0.0
      %840 = vmatprep.subr.mxu0 0.0
      %841 = vmatpush1.xpose.msra.mxu0 0.0
      %842 = vmatprep.subr.mxu0 0.0
      %843 = vmatpush1.xpose.msra.mxu0 0.0
      %844 = vmatprep.subr.mxu0 0.0
      %845 = vmatpush1.xpose.msra.mxu0 0.0
      %846 = vmatprep.subr.mxu0 0.0
      %847 = vmatpush1.xpose.msra.mxu0 0.0
      %848 = vmatprep.subr.mxu0 0.0
      %849 = vmatpush1.xpose.msra.mxu0 0.0
      %850 = vmatprep.subr.mxu0 0.0
      %851 = vmatpush1.xpose.msra.mxu0 0.0
      %852 = vmatprep.subr.mxu0 0.0
      %853 = vmatpush1.xpose.msra.mxu0 0.0
      %854 = vmatprep.subr.mxu0 0.0
      %855 = vmatpush1.xpose.msra.mxu0 0.0
      %856 = vmatprep.subr.mxu0 0.0
      %857 = vmatpush1.xpose.msra.mxu0 0.0
      %858 = vmatprep.mubr.f32.mxu0 %v583
      %859 = vmatmul.mubr.f32.gmra.mrb[0].mxu0 %v582
      %v860 = vpop.f32.mrb[0].mxu0
      %v861 = vadd.f32 %v791, %v860
      %v862 = vpop.f32.mrb[0].mxu0
      %863 = vdwg.mxu0
      %v872 = vcombine.low %v508, %v509
      %v873 = vcombine.low %v510, %v511
      %v874 = vcombine.low %v512, %v513
      %v875 = vcombine.low %v514, %v515
      %v877 = vunpack.c.l.s4 1966171168
      %v878 = vunpack.c.0.s8 %v877
      %v879 = vlaneseq
      %v880 = vshrl.u32 %v879, 7
      %v881 = vsub.s32 %v878, %v880
      %v882 = vrot.slane %v872, %v881
      %v884 = vunpack.c.l.s4 1966171168
      %v885 = vunpack.c.0.s8 %v884
      %v886 = vlaneseq
      %v887 = vshrl.u32 %v886, 7
      %v888 = vsub.s32 %v885, %v887
      %v889 = vrot.slane %v873, %v888
      %v891 = vunpack.c.l.s4 1966171168
      %v892 = vunpack.c.0.s8 %v891
      %v893 = vlaneseq
      %v894 = vshrl.u32 %v893, 7
      %v895 = vsub.s32 %v892, %v894
      %v896 = vrot.slane %v874, %v895
      %v898 = vunpack.c.l.s4 1966171168
      %v899 = vunpack.c.0.s8 %v898
      %v900 = vlaneseq
      %v901 = vshrl.u32 %v900, 7
      %v902 = vsub.s32 %v899, %v901
      %v903 = vrot.slane %v875, %v902
      %v904 = vcombine.low %v882, %v889
      %v905 = vcombine.low %v896, %v903
      %v907 = vunpack.c.l.s4 1966171168
      %v908 = vunpack.c.0.s8 %v907
      %v909 = vlaneseq
      %v910 = vshrl.u32 %v909, 7
      %v911 = vsub.s32 %v908, %v910
      %v912 = vrot.slane %v904, %v911
      %v914 = vunpack.c.l.s4 1966171168
      %v915 = vunpack.c.0.s8 %v914
      %v916 = vlaneseq
      %v917 = vshrl.u32 %v916, 7
      %v918 = vsub.s32 %v915, %v917
      %v919 = vrot.slane %v905, %v918
      %v920 = vcombine.low %v912, %v919
      %922 = vst [vmem:[%s181] sm:$0xff] %v920
      %vm923 = vcmask 253952
      %924 = vst.msk [vmem:[%s184] sm:$0x1] %vm923, %v861
      %p925 = scmp.lt.s32.totalorder %s22, 1
      %s926 = scalar_select %p925, %s22, 1
      %s927 = smul.addr %s926, 8
      %s928 = scalar_lea.vmem %s3, %s927
      %p929 = scmp.lt.s32.totalorder %s22, 1
      %s930 = scalar_select %p929, %s22, 1
      %s931 = scalar_lea.vmem %s4, %s930
      // Predicated region
      $region29: #{attn_vgg_before.3} parent=27 // pred_check
        %p932 = pneg %p87
      $region30: #{attn_vgg_before.3} parent=27 // pred_check_branch
        %934 = sbr.rel (%p932) target = $region32
      $region31: #{attn_vgg_before.3} parent=27 // pred_region
        _
      $region32: #{attn_vgg_before.3} parent=27 // pred_fallthru
        _
      // Predicated region
      $region33: #{attn_vgg_before.3} parent=27 // pred_check
        %p935 = pneg %p113
      $region34: #{attn_vgg_before.3} parent=27 // pred_check_branch
        %937 = sbr.rel (%p935) target = $region36
      $region35: #{attn_vgg_before.3} parent=27 // pred_region
        _
      $region36: #{attn_vgg_before.3} parent=27 // pred_fallthru
        _
    $region28: #{attn_vgg_before.3} parent=5 // pred_fallthru
      _
    %p938 = scmp.le.s32.totalorder 2, %s17
    // Predicated region
    $region37: #{attn_vgg_before.3} parent=5 // pred_check
      %p939 = pneg %p938
    $region38: #{attn_vgg_before.3} parent=5 // pred_check_branch
      %941 = sbr.rel (%p939) target = $region40
    $region39: #{attn_vgg_before.3} parent=5 // pred_region
      %s942 = ssub.s32 %s17, 2
      // Predicated region
      $region41: #{attn_vgg_before.3} parent=39 // pred_check
        %p943 = pneg %p93
      $region42: #{attn_vgg_before.3} parent=39 // pred_check_branch
        %945 = sbr.rel (%p943) target = $region44
      $region43: #{attn_vgg_before.3} parent=39 // pred_region
        %p946 = scmp.lt.s32.totalorder %s23, 1
        %s947 = scalar_select %p946, %s23, 1
        %s948 = smul.addr %s947, 8
        %s949 = scalar_lea.vmem %s3, %s948
      $region44: #{attn_vgg_before.3} parent=39 // pred_fallthru
        _
      // Predicated region
      $region45: #{attn_vgg_before.3} parent=39 // pred_check
        %p950 = pneg %p119
      $region46: #{attn_vgg_before.3} parent=39 // pred_check_branch
        %952 = sbr.rel (%p950) target = $region48
      $region47: #{attn_vgg_before.3} parent=39 // pred_region
        %p953 = scmp.lt.s32.totalorder %s23, 1
        %s954 = scalar_select %p953, %s23, 1
        %s955 = scalar_lea.vmem %s4, %s954
      $region48: #{attn_vgg_before.3} parent=39 // pred_fallthru
        _
    $region40: #{attn_vgg_before.3} parent=5 // pred_fallthru
      _
  $region6: #{attn_vgg_before.3} parent=0 // loop_footer
    %s21 = sadd.s32 1, %s17
  $region7: #{attn_vgg_before.3} parent=0 // loop_footer_branch
    %16 = sbr.rel target = $region3
  $region8: #{attn_vgg_before.3} parent=0 // loop_exit
    _

</llo_original>
